<compile_context>
chip_gen: v6e
topology: v6e:2x2x1
jax: 0.10.0
libtpu: 0.0.40
codegen_flags: <defaults>
</compile_context>

<pallas_src>
import jax
import jax.numpy as jnp
from jax import lax
from jax.experimental import pallas as pl
from jax.experimental.pallas import tpu as pltpu


def gru_kernel(x2d_ref, wih_ref, whh_ref, bfold_ref, bhn_ref, h0_ref,
               y_ref, hN_ref, gir_s, giz_s, gin_s):
    """Single invocation: phase-1 batched input projection, then the time recurrence.

    x2d_ref:  (T*B, D_in)     flattened input sequence
    wih_ref:  (3, D_in, H)    per-gate input weights (r, z, n), transposed
    whh_ref:  (3, H, H)       per-gate hidden weights (r, z, n), transposed
    bfold_ref:(3, 1, H)       folded biases [b_ir+b_hr, b_iz+b_hz, b_in]
    bhn_ref:  (1, H)          b_hn (must stay inside r * (...))
    h0_ref:   (B, H)          initial hidden state
    y_ref:    (T, B, H)       outputs
    hN_ref:   (B, H)          final hidden state
    gir_s/giz_s/gin_s: (T*B, H) f32 VMEM scratch for the precomputed input projections
    """
    T, B, H = y_ref.shape

    x2d = x2d_ref[...].astype(jnp.float32)

    # ---- Phase 1: batched input projections (off the serial critical path) ----
    gir_s[...] = jnp.dot(x2d, wih_ref[0], preferred_element_type=jnp.float32) + bfold_ref[0]
    giz_s[...] = jnp.dot(x2d, wih_ref[1], preferred_element_type=jnp.float32) + bfold_ref[1]
    gin_s[...] = jnp.dot(x2d, wih_ref[2], preferred_element_type=jnp.float32) + bfold_ref[2]

    # ---- Hoisted loads / broadcasts (loop-invariant) ----
    w_hr = whh_ref[0]
    w_hz = whh_ref[1]
    w_hn = whh_ref[2]
    b_hn = jnp.broadcast_to(bhn_ref[...], (B, H)).astype(jnp.float32)

    # ---- Phase 2: serial recurrence, h carried in registers ----
    def step(t, h):
        row = pl.ds(pl.multiple_of(t * B, B), B)
        g_r = gir_s[row, :]
        g_z = giz_s[row, :]
        g_n = gin_s[row, :]

        h_r = jnp.dot(h, w_hr, preferred_element_type=jnp.float32)
        h_z = jnp.dot(h, w_hz, preferred_element_type=jnp.float32)
        h_n = jnp.dot(h, w_hn, preferred_element_type=jnp.float32)

        r = jax.nn.sigmoid(g_r + h_r)
        z = jax.nn.sigmoid(g_z + h_z)
        n = jnp.tanh(g_n + r * (h_n + b_hn))
        h_new = n + z * (h - n)            # == (1 - z) * n + z * h

        y_ref[t] = h_new.astype(y_ref.dtype)
        return h_new

    h_last = lax.fori_loop(0, T, step, h0_ref[...].astype(jnp.float32), unroll=True)
    hN_ref[...] = h_last.astype(hN_ref.dtype)


def gru_layer(x, h0, w_ih, w_hh, b_ih, b_hh):
    """x: (T, B, D_in); h0: (B, H); w_ih: (3H, D_in); w_hh: (3H, H); biases: (3H,).

    Returns (y, (h_n,)) with y: (T, B, H), h_n: (B, H)  -- mirrors GRULayer.forward.
    """
    T, B, D_in = x.shape
    H = w_hh.shape[1]
    f32 = jnp.float32

    # Per-gate weight slabs (gate order r, z, n), transposed for row-vector @ W.
    wih_s = jnp.transpose(w_ih.reshape(3, H, D_in).astype(f32), (0, 2, 1))  # (3, D_in, H)
    whh_s = jnp.transpose(w_hh.reshape(3, H, H).astype(f32), (0, 2, 1))     # (3, H, H)

    b_ih_g = b_ih.reshape(3, 1, H).astype(f32)
    b_hh_g = b_hh.reshape(3, 1, H).astype(f32)
    # Fold: r,z gates take b_i + b_h; n gate keeps only b_in here (b_hn applied
    # inside r * (W_hn h + b_hn) in the kernel).
    bfold = jnp.concatenate(
        [b_ih_g[0:1] + b_hh_g[0:1],
         b_ih_g[1:2] + b_hh_g[1:2],
         b_ih_g[2:3]],
        axis=0)                                                              # (3, 1, H)
    bhn = b_hh_g[2]                                                          # (1, H)

    x2d = x.reshape(T * B, D_in)

    vmem = pl.BlockSpec(memory_space=pltpu.MemorySpace.VMEM)
    y, h_n = pl.pallas_call(
        gru_kernel,
        out_shape=(
            jax.ShapeDtypeStruct((T, B, H), x.dtype),
            jax.ShapeDtypeStruct((B, H), x.dtype),
        ),
        in_specs=[vmem] * 6,
        out_specs=(pl.BlockSpec(memory_space=pltpu.MemorySpace.VMEM),
                   pl.BlockSpec(memory_space=pltpu.MemorySpace.VMEM)),
        scratch_shapes=[pltpu.VMEM((T * B, H), jnp.float32) for _ in range(3)],
    )(x2d, wih_s, whh_s, bfold, bhn, h0)

    return y, (h_n,)


def gru_reference(x, h0, w_ih, w_hh, b_ih, b_hh):
    """Pure-JAX reference (matches torch.nn.GRU single layer)."""
    H = w_hh.shape[1]

    def step(h, x_t):
        gi = x_t @ w_ih.T + b_ih
        gh = h @ w_hh.T + b_hh
        i_r, i_z, i_n = gi[:, :H], gi[:, H:2 * H], gi[:, 2 * H:]
        h_r, h_z, h_n = gh[:, :H], gh[:, H:2 * H], gh[:, 2 * H:]
        r = jax.nn.sigmoid(i_r + h_r)
        z = jax.nn.sigmoid(i_z + h_z)
        n = jnp.tanh(i_n + r * h_n)
        h_new = (1.0 - z) * n + z * h
        return h_new, h_new

    h_n, ys = lax.scan(step, h0, x)
    return ys, (h_n,)


if __name__ == "__main__":
    # Small shapes implied by the module's forward: seq=8, batch=4, input=16, hidden=32
    T, B, D_IN, HID = 8, 4, 16, 32

    key = jax.random.PRNGKey(0)
    k_x, k_wih, k_whh, k_bih, k_bhh = jax.random.split(key, 5)

    # Deterministic parameter init (nn.GRU uses U(-1/sqrt(H), 1/sqrt(H)))
    bound = 1.0 / jnp.sqrt(jnp.float32(HID))
    w_ih = jax.random.uniform(k_wih, (3 * HID, D_IN), jnp.float32, -bound, bound)
    w_hh = jax.random.uniform(k_whh, (3 * HID, HID), jnp.float32, -bound, bound)
    b_ih = jax.random.uniform(k_bih, (3 * HID,), jnp.float32, -bound, bound)
    b_hh = jax.random.uniform(k_bhh, (3 * HID,), jnp.float32, -bound, bound)

    x = jax.random.normal(k_x, (T, B, D_IN), jnp.float32)
    h0 = jnp.zeros((B, HID), jnp.float32)   # hx=None -> zero initial state

    y, (h_n,) = gru_layer(x, h0, w_ih, w_hh, b_ih, b_hh)
    jax.block_until_ready(y)
    jax.block_until_ready(h_n)

    y_ref, (h_ref,) = gru_reference(x, h0, w_ih, w_hh, b_ih, b_hh)
    assert jnp.allclose(y, y_ref, atol=1e-5, rtol=1e-5), "output mismatch"
    assert jnp.allclose(h_n, h_ref, atol=1e-5, rtol=1e-5), "state mismatch"

    print("KERNEL_OK")
</pallas_src>

<mosaic_0001>
module attributes {stable_mosaic.version = 11 : i64} {
  func.func @gru_kernel(%arg0: memref<32x16xf32, #tpu.memory_space<vmem>>, %arg1: memref<3x16x32xf32, #tpu.memory_space<vmem>>, %arg2: memref<3x32x32xf32, #tpu.memory_space<vmem>>, %arg3: memref<3x1x32xf32, #tpu.memory_space<vmem>>, %arg4: memref<1x32xf32, #tpu.memory_space<vmem>>, %arg5: memref<4x32xf32, #tpu.memory_space<vmem>>, %arg6: memref<8x4x32xf32, #tpu.memory_space<vmem>>, %arg7: memref<4x32xf32, #tpu.memory_space<vmem>>, %arg8: memref<32x32xf32, #tpu.memory_space<vmem>>, %arg9: memref<32x32xf32, #tpu.memory_space<vmem>>, %arg10: memref<32x32xf32, #tpu.memory_space<vmem>>) attributes {dimension_semantics = [], scalar_prefetch = 0 : i64, scratch_operands = 3 : i64, tpu.core_type = #tpu.core_type<tc>} {
    %c0 = arith.constant 0 : index
    %c0_0 = arith.constant 0 : index
    %0 = vector.load %arg0[%c0, %c0_0] : memref<32x16xf32, #tpu.memory_space<vmem>>, vector<32x16xf32>
    %c0_1 = arith.constant 0 : index
    %c0_2 = arith.constant 0 : index
    %c0_3 = arith.constant 0 : index
    %1 = vector.load %arg1[%c0_1, %c0_2, %c0_3] : memref<3x16x32xf32, #tpu.memory_space<vmem>>, vector<1x16x32xf32>
    %2 = vector.shape_cast %1 : vector<1x16x32xf32> to vector<16x32xf32>
    %cst = arith.constant dense<0.000000e+00> : vector<32x32xf32>
    %3 = tpu.matmul %0, %2, %cst {dimension_numbers = #tpu.dot_dimension_numbers<[1], [0], [0], [1], [0, 0, 1, 1], [], []>} : vector<32x16xf32>, vector<16x32xf32>, vector<32x32xf32> -> vector<32x32xf32>
    %c0_4 = arith.constant 0 : index
    %c0_5 = arith.constant 0 : index
    %c0_6 = arith.constant 0 : index
    %4 = vector.load %arg3[%c0_4, %c0_5, %c0_6] : memref<3x1x32xf32, #tpu.memory_space<vmem>>, vector<1x1x32xf32>
    %5 = vector.shape_cast %4 : vector<1x1x32xf32> to vector<1x32xf32>
    %6 = vector.broadcast %5 : vector<1x32xf32> to vector<32x32xf32>
    %7 = arith.addf %3, %6 : vector<32x32xf32>
    %c0_7 = arith.constant 0 : index
    %c0_8 = arith.constant 0 : index
    %8 = vector.load %arg8[%c0_7, %c0_8] : memref<32x32xf32, #tpu.memory_space<vmem>>, vector<32x32xf32>
    tpu.vector_store %arg8[%c0_7, %c0_8], %7 {strides = array<i32>} : memref<32x32xf32, #tpu.memory_space<vmem>>, vector<32x32xf32>,
    %c1 = arith.constant 1 : index
    %c0_9 = arith.constant 0 : index
    %c0_10 = arith.constant 0 : index
    %9 = vector.load %arg1[%c1, %c0_9, %c0_10] : memref<3x16x32xf32, #tpu.memory_space<vmem>>, vector<1x16x32xf32>
    %10 = vector.shape_cast %9 : vector<1x16x32xf32> to vector<16x32xf32>
    %cst_11 = arith.constant dense<0.000000e+00> : vector<32x32xf32>
    %11 = tpu.matmul %0, %10, %cst_11 {dimension_numbers = #tpu.dot_dimension_numbers<[1], [0], [0], [1], [0, 0, 1, 1], [], []>} : vector<32x16xf32>, vector<16x32xf32>, vector<32x32xf32> -> vector<32x32xf32>
    %c1_12 = arith.constant 1 : index
    %c0_13 = arith.constant 0 : index
    %c0_14 = arith.constant 0 : index
    %12 = vector.load %arg3[%c1_12, %c0_13, %c0_14] : memref<3x1x32xf32, #tpu.memory_space<vmem>>, vector<1x1x32xf32>
    %13 = vector.shape_cast %12 : vector<1x1x32xf32> to vector<1x32xf32>
    %14 = vector.broadcast %13 : vector<1x32xf32> to vector<32x32xf32>
    %15 = arith.addf %11, %14 : vector<32x32xf32>
    %c0_15 = arith.constant 0 : index
    %c0_16 = arith.constant 0 : index
    %16 = vector.load %arg9[%c0_15, %c0_16] : memref<32x32xf32, #tpu.memory_space<vmem>>, vector<32x32xf32>
    tpu.vector_store %arg9[%c0_15, %c0_16], %15 {strides = array<i32>} : memref<32x32xf32, #tpu.memory_space<vmem>>, vector<32x32xf32>,
    %c2 = arith.constant 2 : index
    %c0_17 = arith.constant 0 : index
    %c0_18 = arith.constant 0 : index
    %17 = vector.load %arg1[%c2, %c0_17, %c0_18] : memref<3x16x32xf32, #tpu.memory_space<vmem>>, vector<1x16x32xf32>
    %18 = vector.shape_cast %17 : vector<1x16x32xf32> to vector<16x32xf32>
    %cst_19 = arith.constant dense<0.000000e+00> : vector<32x32xf32>
    %19 = tpu.matmul %0, %18, %cst_19 {dimension_numbers = #tpu.dot_dimension_numbers<[1], [0], [0], [1], [0, 0, 1, 1], [], []>} : vector<32x16xf32>, vector<16x32xf32>, vector<32x32xf32> -> vector<32x32xf32>
    %c2_20 = arith.constant 2 : index
    %c0_21 = arith.constant 0 : index
    %c0_22 = arith.constant 0 : index
    %20 = vector.load %arg3[%c2_20, %c0_21, %c0_22] : memref<3x1x32xf32, #tpu.memory_space<vmem>>, vector<1x1x32xf32>
    %21 = vector.shape_cast %20 : vector<1x1x32xf32> to vector<1x32xf32>
    %22 = vector.broadcast %21 : vector<1x32xf32> to vector<32x32xf32>
    %23 = arith.addf %19, %22 : vector<32x32xf32>
    %c0_23 = arith.constant 0 : index
    %c0_24 = arith.constant 0 : index
    %24 = vector.load %arg10[%c0_23, %c0_24] : memref<32x32xf32, #tpu.memory_space<vmem>>, vector<32x32xf32>
    tpu.vector_store %arg10[%c0_23, %c0_24], %23 {strides = array<i32>} : memref<32x32xf32, #tpu.memory_space<vmem>>, vector<32x32xf32>,
    %c0_25 = arith.constant 0 : index
    %c0_26 = arith.constant 0 : index
    %c0_27 = arith.constant 0 : index
    %25 = vector.load %arg2[%c0_25, %c0_26, %c0_27] : memref<3x32x32xf32, #tpu.memory_space<vmem>>, vector<1x32x32xf32>
    %26 = vector.shape_cast %25 : vector<1x32x32xf32> to vector<32x32xf32>
    %c1_28 = arith.constant 1 : index
    %c0_29 = arith.constant 0 : index
    %c0_30 = arith.constant 0 : index
    %27 = vector.load %arg2[%c1_28, %c0_29, %c0_30] : memref<3x32x32xf32, #tpu.memory_space<vmem>>, vector<1x32x32xf32>
    %28 = vector.shape_cast %27 : vector<1x32x32xf32> to vector<32x32xf32>
    %c2_31 = arith.constant 2 : index
    %c0_32 = arith.constant 0 : index
    %c0_33 = arith.constant 0 : index
    %29 = vector.load %arg2[%c2_31, %c0_32, %c0_33] : memref<3x32x32xf32, #tpu.memory_space<vmem>>, vector<1x32x32xf32>
    %30 = vector.shape_cast %29 : vector<1x32x32xf32> to vector<32x32xf32>
    %c0_34 = arith.constant 0 : index
    %c0_35 = arith.constant 0 : index
    %31 = vector.load %arg4[%c0_34, %c0_35] : memref<1x32xf32, #tpu.memory_space<vmem>>, vector<1x32xf32>
    %32 = vector.shape_cast %31 : vector<1x32xf32> to vector<1x32xf32>
    %33 = vector.broadcast %32 : vector<1x32xf32> to vector<4x32xf32>
    %c0_36 = arith.constant 0 : index
    %c0_37 = arith.constant 0 : index
    %34 = vector.load %arg5[%c0_36, %c0_37] : memref<4x32xf32, #tpu.memory_space<vmem>>, vector<4x32xf32>
    %c0_i32 = arith.constant 0 : i32
    %c4_i32 = arith.constant 4 : i32
    %35 = arith.muli %c0_i32, %c4_i32 : i32
    %36 = tpu.assume_multiple %35, 4 : i32
    %37 = arith.index_cast %36 : i32 to index
    %c0_38 = arith.constant 0 : index
    %38 = vector.load %arg8[%37, %c0_38] : memref<32x32xf32, #tpu.memory_space<vmem>>, vector<4x32xf32>
    %39 = arith.index_cast %36 : i32 to index
    %c0_39 = arith.constant 0 : index
    %40 = vector.load %arg9[%39, %c0_39] : memref<32x32xf32, #tpu.memory_space<vmem>>, vector<4x32xf32>
    %41 = arith.index_cast %36 : i32 to index
    %c0_40 = arith.constant 0 : index
    %42 = vector.load %arg10[%41, %c0_40] : memref<32x32xf32, #tpu.memory_space<vmem>>, vector<4x32xf32>
    %cst_41 = arith.constant dense<0.000000e+00> : vector<4x32xf32>
    %43 = tpu.matmul %34, %26, %cst_41 {dimension_numbers = #tpu.dot_dimension_numbers<[1], [0], [0], [1], [0, 0, 1, 1], [], []>} : vector<4x32xf32>, vector<32x32xf32>, vector<4x32xf32> -> vector<4x32xf32>
    %cst_42 = arith.constant dense<0.000000e+00> : vector<4x32xf32>
    %44 = tpu.matmul %34, %28, %cst_42 {dimension_numbers = #tpu.dot_dimension_numbers<[1], [0], [0], [1], [0, 0, 1, 1], [], []>} : vector<4x32xf32>, vector<32x32xf32>, vector<4x32xf32> -> vector<4x32xf32>
    %cst_43 = arith.constant dense<0.000000e+00> : vector<4x32xf32>
    %45 = tpu.matmul %34, %30, %cst_43 {dimension_numbers = #tpu.dot_dimension_numbers<[1], [0], [0], [1], [0, 0, 1, 1], [], []>} : vector<4x32xf32>, vector<32x32xf32>, vector<4x32xf32> -> vector<4x32xf32>
    %46 = arith.addf %38, %43 : vector<4x32xf32>
    %47 = arith.negf %46 : vector<4x32xf32>
    %48 = math.exp %47 : vector<4x32xf32>
    %cst_44 = arith.constant 1.000000e+00 : f32
    %49 = vector.broadcast %cst_44 : f32 to vector<4x32xf32>
    %50 = arith.addf %49, %48 : vector<4x32xf32>
    %51 = arith.divf %49, %50 : vector<4x32xf32>
    %52 = arith.addf %40, %44 : vector<4x32xf32>
    %53 = arith.negf %52 : vector<4x32xf32>
    %54 = math.exp %53 : vector<4x32xf32>
    %cst_45 = arith.constant 1.000000e+00 : f32
    %55 = vector.broadcast %cst_45 : f32 to vector<4x32xf32>
    %56 = arith.addf %55, %54 : vector<4x32xf32>
    %57 = arith.divf %55, %56 : vector<4x32xf32>
    %58 = arith.addf %45, %33 : vector<4x32xf32>
    %59 = arith.mulf %51, %58 : vector<4x32xf32>
    %60 = arith.addf %42, %59 : vector<4x32xf32>
    %61 = math.tanh %60 : vector<4x32xf32>
    %62 = arith.subf %34, %61 : vector<4x32xf32>
    %63 = arith.mulf %57, %62 : vector<4x32xf32>
    %64 = arith.addf %61, %63 : vector<4x32xf32>
    %65 = arith.index_cast %c0_i32 : i32 to index
    %c0_46 = arith.constant 0 : index
    %c0_47 = arith.constant 0 : index
    %66 = vector.load %arg6[%65, %c0_46, %c0_47] : memref<8x4x32xf32, #tpu.memory_space<vmem>>, vector<1x4x32xf32>
    %67 = vector.shape_cast %66 : vector<1x4x32xf32> to vector<4x32xf32>
    %68 = vector.shape_cast %64 : vector<4x32xf32> to vector<1x4x32xf32>
    tpu.vector_store %arg6[%65, %c0_46, %c0_47], %68 {strides = array<i32>} : memref<8x4x32xf32, #tpu.memory_space<vmem>>, vector<1x4x32xf32>,
    %c1_i32 = arith.constant 1 : i32
    %c4_i32_48 = arith.constant 4 : i32
    %69 = arith.muli %c1_i32, %c4_i32_48 : i32
    %70 = tpu.assume_multiple %69, 4 : i32
    %71 = arith.index_cast %70 : i32 to index
    %c0_49 = arith.constant 0 : index
    %72 = vector.load %arg8[%71, %c0_49] : memref<32x32xf32, #tpu.memory_space<vmem>>, vector<4x32xf32>
    %73 = arith.index_cast %70 : i32 to index
    %c0_50 = arith.constant 0 : index
    %74 = vector.load %arg9[%73, %c0_50] : memref<32x32xf32, #tpu.memory_space<vmem>>, vector<4x32xf32>
    %75 = arith.index_cast %70 : i32 to index
    %c0_51 = arith.constant 0 : index
    %76 = vector.load %arg10[%75, %c0_51] : memref<32x32xf32, #tpu.memory_space<vmem>>, vector<4x32xf32>
    %cst_52 = arith.constant dense<0.000000e+00> : vector<4x32xf32>
    %77 = tpu.matmul %64, %26, %cst_52 {dimension_numbers = #tpu.dot_dimension_numbers<[1], [0], [0], [1], [0, 0, 1, 1], [], []>} : vector<4x32xf32>, vector<32x32xf32>, vector<4x32xf32> -> vector<4x32xf32>
    %cst_53 = arith.constant dense<0.000000e+00> : vector<4x32xf32>
    %78 = tpu.matmul %64, %28, %cst_53 {dimension_numbers = #tpu.dot_dimension_numbers<[1], [0], [0], [1], [0, 0, 1, 1], [], []>} : vector<4x32xf32>, vector<32x32xf32>, vector<4x32xf32> -> vector<4x32xf32>
    %cst_54 = arith.constant dense<0.000000e+00> : vector<4x32xf32>
    %79 = tpu.matmul %64, %30, %cst_54 {dimension_numbers = #tpu.dot_dimension_numbers<[1], [0], [0], [1], [0, 0, 1, 1], [], []>} : vector<4x32xf32>, vector<32x32xf32>, vector<4x32xf32> -> vector<4x32xf32>
    %80 = arith.addf %72, %77 : vector<4x32xf32>
    %81 = arith.negf %80 : vector<4x32xf32>
    %82 = math.exp %81 : vector<4x32xf32>
    %cst_55 = arith.constant 1.000000e+00 : f32
    %83 = vector.broadcast %cst_55 : f32 to vector<4x32xf32>
    %84 = arith.addf %83, %82 : vector<4x32xf32>
    %85 = arith.divf %83, %84 : vector<4x32xf32>
    %86 = arith.addf %74, %78 : vector<4x32xf32>
    %87 = arith.negf %86 : vector<4x32xf32>
    %88 = math.exp %87 : vector<4x32xf32>
    %cst_56 = arith.constant 1.000000e+00 : f32
    %89 = vector.broadcast %cst_56 : f32 to vector<4x32xf32>
    %90 = arith.addf %89, %88 : vector<4x32xf32>
    %91 = arith.divf %89, %90 : vector<4x32xf32>
    %92 = arith.addf %79, %33 : vector<4x32xf32>
    %93 = arith.mulf %85, %92 : vector<4x32xf32>
    %94 = arith.addf %76, %93 : vector<4x32xf32>
    %95 = math.tanh %94 : vector<4x32xf32>
    %96 = arith.subf %64, %95 : vector<4x32xf32>
    %97 = arith.mulf %91, %96 : vector<4x32xf32>
    %98 = arith.addf %95, %97 : vector<4x32xf32>
    %99 = arith.index_cast %c1_i32 : i32 to index
    %c0_57 = arith.constant 0 : index
    %c0_58 = arith.constant 0 : index
    %100 = vector.load %arg6[%99, %c0_57, %c0_58] : memref<8x4x32xf32, #tpu.memory_space<vmem>>, vector<1x4x32xf32>
    %101 = vector.shape_cast %100 : vector<1x4x32xf32> to vector<4x32xf32>
    %102 = vector.shape_cast %98 : vector<4x32xf32> to vector<1x4x32xf32>
    tpu.vector_store %arg6[%99, %c0_57, %c0_58], %102 {strides = array<i32>} : memref<8x4x32xf32, #tpu.memory_space<vmem>>, vector<1x4x32xf32>,
    %c2_i32 = arith.constant 2 : i32
    %c4_i32_59 = arith.constant 4 : i32
    %103 = arith.muli %c2_i32, %c4_i32_59 : i32
    %104 = tpu.assume_multiple %103, 4 : i32
    %105 = arith.index_cast %104 : i32 to index
    %c0_60 = arith.constant 0 : index
    %106 = vector.load %arg8[%105, %c0_60] : memref<32x32xf32, #tpu.memory_space<vmem>>, vector<4x32xf32>
    %107 = arith.index_cast %104 : i32 to index
    %c0_61 = arith.constant 0 : index
    %108 = vector.load %arg9[%107, %c0_61] : memref<32x32xf32, #tpu.memory_space<vmem>>, vector<4x32xf32>
    %109 = arith.index_cast %104 : i32 to index
    %c0_62 = arith.constant 0 : index
    %110 = vector.load %arg10[%109, %c0_62] : memref<32x32xf32, #tpu.memory_space<vmem>>, vector<4x32xf32>
    %cst_63 = arith.constant dense<0.000000e+00> : vector<4x32xf32>
    %111 = tpu.matmul %98, %26, %cst_63 {dimension_numbers = #tpu.dot_dimension_numbers<[1], [0], [0], [1], [0, 0, 1, 1], [], []>} : vector<4x32xf32>, vector<32x32xf32>, vector<4x32xf32> -> vector<4x32xf32>
    %cst_64 = arith.constant dense<0.000000e+00> : vector<4x32xf32>
    %112 = tpu.matmul %98, %28, %cst_64 {dimension_numbers = #tpu.dot_dimension_numbers<[1], [0], [0], [1], [0, 0, 1, 1], [], []>} : vector<4x32xf32>, vector<32x32xf32>, vector<4x32xf32> -> vector<4x32xf32>
    %cst_65 = arith.constant dense<0.000000e+00> : vector<4x32xf32>
    %113 = tpu.matmul %98, %30, %cst_65 {dimension_numbers = #tpu.dot_dimension_numbers<[1], [0], [0], [1], [0, 0, 1, 1], [], []>} : vector<4x32xf32>, vector<32x32xf32>, vector<4x32xf32> -> vector<4x32xf32>
    %114 = arith.addf %106, %111 : vector<4x32xf32>
    %115 = arith.negf %114 : vector<4x32xf32>
    %116 = math.exp %115 : vector<4x32xf32>
    %cst_66 = arith.constant 1.000000e+00 : f32
    %117 = vector.broadcast %cst_66 : f32 to vector<4x32xf32>
    %118 = arith.addf %117, %116 : vector<4x32xf32>
    %119 = arith.divf %117, %118 : vector<4x32xf32>
    %120 = arith.addf %108, %112 : vector<4x32xf32>
    %121 = arith.negf %120 : vector<4x32xf32>
    %122 = math.exp %121 : vector<4x32xf32>
    %cst_67 = arith.constant 1.000000e+00 : f32
    %123 = vector.broadcast %cst_67 : f32 to vector<4x32xf32>
    %124 = arith.addf %123, %122 : vector<4x32xf32>
    %125 = arith.divf %123, %124 : vector<4x32xf32>
    %126 = arith.addf %113, %33 : vector<4x32xf32>
    %127 = arith.mulf %119, %126 : vector<4x32xf32>
    %128 = arith.addf %110, %127 : vector<4x32xf32>
    %129 = math.tanh %128 : vector<4x32xf32>
    %130 = arith.subf %98, %129 : vector<4x32xf32>
    %131 = arith.mulf %125, %130 : vector<4x32xf32>
    %132 = arith.addf %129, %131 : vector<4x32xf32>
    %133 = arith.index_cast %c2_i32 : i32 to index
    %c0_68 = arith.constant 0 : index
    %c0_69 = arith.constant 0 : index
    %134 = vector.load %arg6[%133, %c0_68, %c0_69] : memref<8x4x32xf32, #tpu.memory_space<vmem>>, vector<1x4x32xf32>
    %135 = vector.shape_cast %134 : vector<1x4x32xf32> to vector<4x32xf32>
    %136 = vector.shape_cast %132 : vector<4x32xf32> to vector<1x4x32xf32>
    tpu.vector_store %arg6[%133, %c0_68, %c0_69], %136 {strides = array<i32>} : memref<8x4x32xf32, #tpu.memory_space<vmem>>, vector<1x4x32xf32>,
    %c3_i32 = arith.constant 3 : i32
    %c4_i32_70 = arith.constant 4 : i32
    %137 = arith.muli %c3_i32, %c4_i32_70 : i32
    %138 = tpu.assume_multiple %137, 4 : i32
    %139 = arith.index_cast %138 : i32 to index
    %c0_71 = arith.constant 0 : index
    %140 = vector.load %arg8[%139, %c0_71] : memref<32x32xf32, #tpu.memory_space<vmem>>, vector<4x32xf32>
    %141 = arith.index_cast %138 : i32 to index
    %c0_72 = arith.constant 0 : index
    %142 = vector.load %arg9[%141, %c0_72] : memref<32x32xf32, #tpu.memory_space<vmem>>, vector<4x32xf32>
    %143 = arith.index_cast %138 : i32 to index
    %c0_73 = arith.constant 0 : index
    %144 = vector.load %arg10[%143, %c0_73] : memref<32x32xf32, #tpu.memory_space<vmem>>, vector<4x32xf32>
    %cst_74 = arith.constant dense<0.000000e+00> : vector<4x32xf32>
    %145 = tpu.matmul %132, %26, %cst_74 {dimension_numbers = #tpu.dot_dimension_numbers<[1], [0], [0], [1], [0, 0, 1, 1], [], []>} : vector<4x32xf32>, vector<32x32xf32>, vector<4x32xf32> -> vector<4x32xf32>
    %cst_75 = arith.constant dense<0.000000e+00> : vector<4x32xf32>
    %146 = tpu.matmul %132, %28, %cst_75 {dimension_numbers = #tpu.dot_dimension_numbers<[1], [0], [0], [1], [0, 0, 1, 1], [], []>} : vector<4x32xf32>, vector<32x32xf32>, vector<4x32xf32> -> vector<4x32xf32>
    %cst_76 = arith.constant dense<0.000000e+00> : vector<4x32xf32>
    %147 = tpu.matmul %132, %30, %cst_76 {dimension_numbers = #tpu.dot_dimension_numbers<[1], [0], [0], [1], [0, 0, 1, 1], [], []>} : vector<4x32xf32>, vector<32x32xf32>, vector<4x32xf32> -> vector<4x32xf32>
    %148 = arith.addf %140, %145 : vector<4x32xf32>
    %149 = arith.negf %148 : vector<4x32xf32>
    %150 = math.exp %149 : vector<4x32xf32>
    %cst_77 = arith.constant 1.000000e+00 : f32
    %151 = vector.broadcast %cst_77 : f32 to vector<4x32xf32>
    %152 = arith.addf %151, %150 : vector<4x32xf32>
    %153 = arith.divf %151, %152 : vector<4x32xf32>
    %154 = arith.addf %142, %146 : vector<4x32xf32>
    %155 = arith.negf %154 : vector<4x32xf32>
    %156 = math.exp %155 : vector<4x32xf32>
    %cst_78 = arith.constant 1.000000e+00 : f32
    %157 = vector.broadcast %cst_78 : f32 to vector<4x32xf32>
    %158 = arith.addf %157, %156 : vector<4x32xf32>
    %159 = arith.divf %157, %158 : vector<4x32xf32>
    %160 = arith.addf %147, %33 : vector<4x32xf32>
    %161 = arith.mulf %153, %160 : vector<4x32xf32>
    %162 = arith.addf %144, %161 : vector<4x32xf32>
    %163 = math.tanh %162 : vector<4x32xf32>
    %164 = arith.subf %132, %163 : vector<4x32xf32>
    %165 = arith.mulf %159, %164 : vector<4x32xf32>
    %166 = arith.addf %163, %165 : vector<4x32xf32>
    %167 = arith.index_cast %c3_i32 : i32 to index
    %c0_79 = arith.constant 0 : index
    %c0_80 = arith.constant 0 : index
    %168 = vector.load %arg6[%167, %c0_79, %c0_80] : memref<8x4x32xf32, #tpu.memory_space<vmem>>, vector<1x4x32xf32>
    %169 = vector.shape_cast %168 : vector<1x4x32xf32> to vector<4x32xf32>
    %170 = vector.shape_cast %166 : vector<4x32xf32> to vector<1x4x32xf32>
    tpu.vector_store %arg6[%167, %c0_79, %c0_80], %170 {strides = array<i32>} : memref<8x4x32xf32, #tpu.memory_space<vmem>>, vector<1x4x32xf32>,
    %c4_i32_81 = arith.constant 4 : i32
    %c4_i32_82 = arith.constant 4 : i32
    %171 = arith.muli %c4_i32_81, %c4_i32_82 : i32
    %172 = tpu.assume_multiple %171, 4 : i32
    %173 = arith.index_cast %172 : i32 to index
    %c0_83 = arith.constant 0 : index
    %174 = vector.load %arg8[%173, %c0_83] : memref<32x32xf32, #tpu.memory_space<vmem>>, vector<4x32xf32>
    %175 = arith.index_cast %172 : i32 to index
    %c0_84 = arith.constant 0 : index
    %176 = vector.load %arg9[%175, %c0_84] : memref<32x32xf32, #tpu.memory_space<vmem>>, vector<4x32xf32>
    %177 = arith.index_cast %172 : i32 to index
    %c0_85 = arith.constant 0 : index
    %178 = vector.load %arg10[%177, %c0_85] : memref<32x32xf32, #tpu.memory_space<vmem>>, vector<4x32xf32>
    %cst_86 = arith.constant dense<0.000000e+00> : vector<4x32xf32>
    %179 = tpu.matmul %166, %26, %cst_86 {dimension_numbers = #tpu.dot_dimension_numbers<[1], [0], [0], [1], [0, 0, 1, 1], [], []>} : vector<4x32xf32>, vector<32x32xf32>, vector<4x32xf32> -> vector<4x32xf32>
    %cst_87 = arith.constant dense<0.000000e+00> : vector<4x32xf32>
    %180 = tpu.matmul %166, %28, %cst_87 {dimension_numbers = #tpu.dot_dimension_numbers<[1], [0], [0], [1], [0, 0, 1, 1], [], []>} : vector<4x32xf32>, vector<32x32xf32>, vector<4x32xf32> -> vector<4x32xf32>
    %cst_88 = arith.constant dense<0.000000e+00> : vector<4x32xf32>
    %181 = tpu.matmul %166, %30, %cst_88 {dimension_numbers = #tpu.dot_dimension_numbers<[1], [0], [0], [1], [0, 0, 1, 1], [], []>} : vector<4x32xf32>, vector<32x32xf32>, vector<4x32xf32> -> vector<4x32xf32>
    %182 = arith.addf %174, %179 : vector<4x32xf32>
    %183 = arith.negf %182 : vector<4x32xf32>
    %184 = math.exp %183 : vector<4x32xf32>
    %cst_89 = arith.constant 1.000000e+00 : f32
    %185 = vector.broadcast %cst_89 : f32 to vector<4x32xf32>
    %186 = arith.addf %185, %184 : vector<4x32xf32>
    %187 = arith.divf %185, %186 : vector<4x32xf32>
    %188 = arith.addf %176, %180 : vector<4x32xf32>
    %189 = arith.negf %188 : vector<4x32xf32>
    %190 = math.exp %189 : vector<4x32xf32>
    %cst_90 = arith.constant 1.000000e+00 : f32
    %191 = vector.broadcast %cst_90 : f32 to vector<4x32xf32>
    %192 = arith.addf %191, %190 : vector<4x32xf32>
    %193 = arith.divf %191, %192 : vector<4x32xf32>
    %194 = arith.addf %181, %33 : vector<4x32xf32>
    %195 = arith.mulf %187, %194 : vector<4x32xf32>
    %196 = arith.addf %178, %195 : vector<4x32xf32>
    %197 = math.tanh %196 : vector<4x32xf32>
    %198 = arith.subf %166, %197 : vector<4x32xf32>
    %199 = arith.mulf %193, %198 : vector<4x32xf32>
    %200 = arith.addf %197, %199 : vector<4x32xf32>
    %201 = arith.index_cast %c4_i32_81 : i32 to index
    %c0_91 = arith.constant 0 : index
    %c0_92 = arith.constant 0 : index
    %202 = vector.load %arg6[%201, %c0_91, %c0_92] : memref<8x4x32xf32, #tpu.memory_space<vmem>>, vector<1x4x32xf32>
    %203 = vector.shape_cast %202 : vector<1x4x32xf32> to vector<4x32xf32>
    %204 = vector.shape_cast %200 : vector<4x32xf32> to vector<1x4x32xf32>
    tpu.vector_store %arg6[%201, %c0_91, %c0_92], %204 {strides = array<i32>} : memref<8x4x32xf32, #tpu.memory_space<vmem>>, vector<1x4x32xf32>,
    %c5_i32 = arith.constant 5 : i32
    %c4_i32_93 = arith.constant 4 : i32
    %205 = arith.muli %c5_i32, %c4_i32_93 : i32
    %206 = tpu.assume_multiple %205, 4 : i32
    %207 = arith.index_cast %206 : i32 to index
    %c0_94 = arith.constant 0 : index
    %208 = vector.load %arg8[%207, %c0_94] : memref<32x32xf32, #tpu.memory_space<vmem>>, vector<4x32xf32>
    %209 = arith.index_cast %206 : i32 to index
    %c0_95 = arith.constant 0 : index
    %210 = vector.load %arg9[%209, %c0_95] : memref<32x32xf32, #tpu.memory_space<vmem>>, vector<4x32xf32>
    %211 = arith.index_cast %206 : i32 to index
    %c0_96 = arith.constant 0 : index
    %212 = vector.load %arg10[%211, %c0_96] : memref<32x32xf32, #tpu.memory_space<vmem>>, vector<4x32xf32>
    %cst_97 = arith.constant dense<0.000000e+00> : vector<4x32xf32>
    %213 = tpu.matmul %200, %26, %cst_97 {dimension_numbers = #tpu.dot_dimension_numbers<[1], [0], [0], [1], [0, 0, 1, 1], [], []>} : vector<4x32xf32>, vector<32x32xf32>, vector<4x32xf32> -> vector<4x32xf32>
    %cst_98 = arith.constant dense<0.000000e+00> : vector<4x32xf32>
    %214 = tpu.matmul %200, %28, %cst_98 {dimension_numbers = #tpu.dot_dimension_numbers<[1], [0], [0], [1], [0, 0, 1, 1], [], []>} : vector<4x32xf32>, vector<32x32xf32>, vector<4x32xf32> -> vector<4x32xf32>
    %cst_99 = arith.constant dense<0.000000e+00> : vector<4x32xf32>
    %215 = tpu.matmul %200, %30, %cst_99 {dimension_numbers = #tpu.dot_dimension_numbers<[1], [0], [0], [1], [0, 0, 1, 1], [], []>} : vector<4x32xf32>, vector<32x32xf32>, vector<4x32xf32> -> vector<4x32xf32>
    %216 = arith.addf %208, %213 : vector<4x32xf32>
    %217 = arith.negf %216 : vector<4x32xf32>
    %218 = math.exp %217 : vector<4x32xf32>
    %cst_100 = arith.constant 1.000000e+00 : f32
    %219 = vector.broadcast %cst_100 : f32 to vector<4x32xf32>
    %220 = arith.addf %219, %218 : vector<4x32xf32>
    %221 = arith.divf %219, %220 : vector<4x32xf32>
    %222 = arith.addf %210, %214 : vector<4x32xf32>
    %223 = arith.negf %222 : vector<4x32xf32>
    %224 = math.exp %223 : vector<4x32xf32>
    %cst_101 = arith.constant 1.000000e+00 : f32
    %225 = vector.broadcast %cst_101 : f32 to vector<4x32xf32>
    %226 = arith.addf %225, %224 : vector<4x32xf32>
    %227 = arith.divf %225, %226 : vector<4x32xf32>
    %228 = arith.addf %215, %33 : vector<4x32xf32>
    %229 = arith.mulf %221, %228 : vector<4x32xf32>
    %230 = arith.addf %212, %229 : vector<4x32xf32>
    %231 = math.tanh %230 : vector<4x32xf32>
    %232 = arith.subf %200, %231 : vector<4x32xf32>
    %233 = arith.mulf %227, %232 : vector<4x32xf32>
    %234 = arith.addf %231, %233 : vector<4x32xf32>
    %235 = arith.index_cast %c5_i32 : i32 to index
    %c0_102 = arith.constant 0 : index
    %c0_103 = arith.constant 0 : index
    %236 = vector.load %arg6[%235, %c0_102, %c0_103] : memref<8x4x32xf32, #tpu.memory_space<vmem>>, vector<1x4x32xf32>
    %237 = vector.shape_cast %236 : vector<1x4x32xf32> to vector<4x32xf32>
    %238 = vector.shape_cast %234 : vector<4x32xf32> to vector<1x4x32xf32>
    tpu.vector_store %arg6[%235, %c0_102, %c0_103], %238 {strides = array<i32>} : memref<8x4x32xf32, #tpu.memory_space<vmem>>, vector<1x4x32xf32>,
    %c6_i32 = arith.constant 6 : i32
    %c4_i32_104 = arith.constant 4 : i32
    %239 = arith.muli %c6_i32, %c4_i32_104 : i32
    %240 = tpu.assume_multiple %239, 4 : i32
    %241 = arith.index_cast %240 : i32 to index
    %c0_105 = arith.constant 0 : index
    %242 = vector.load %arg8[%241, %c0_105] : memref<32x32xf32, #tpu.memory_space<vmem>>, vector<4x32xf32>
    %243 = arith.index_cast %240 : i32 to index
    %c0_106 = arith.constant 0 : index
    %244 = vector.load %arg9[%243, %c0_106] : memref<32x32xf32, #tpu.memory_space<vmem>>, vector<4x32xf32>
    %245 = arith.index_cast %240 : i32 to index
    %c0_107 = arith.constant 0 : index
    %246 = vector.load %arg10[%245, %c0_107] : memref<32x32xf32, #tpu.memory_space<vmem>>, vector<4x32xf32>
    %cst_108 = arith.constant dense<0.000000e+00> : vector<4x32xf32>
    %247 = tpu.matmul %234, %26, %cst_108 {dimension_numbers = #tpu.dot_dimension_numbers<[1], [0], [0], [1], [0, 0, 1, 1], [], []>} : vector<4x32xf32>, vector<32x32xf32>, vector<4x32xf32> -> vector<4x32xf32>
    %cst_109 = arith.constant dense<0.000000e+00> : vector<4x32xf32>
    %248 = tpu.matmul %234, %28, %cst_109 {dimension_numbers = #tpu.dot_dimension_numbers<[1], [0], [0], [1], [0, 0, 1, 1], [], []>} : vector<4x32xf32>, vector<32x32xf32>, vector<4x32xf32> -> vector<4x32xf32>
    %cst_110 = arith.constant dense<0.000000e+00> : vector<4x32xf32>
    %249 = tpu.matmul %234, %30, %cst_110 {dimension_numbers = #tpu.dot_dimension_numbers<[1], [0], [0], [1], [0, 0, 1, 1], [], []>} : vector<4x32xf32>, vector<32x32xf32>, vector<4x32xf32> -> vector<4x32xf32>
    %250 = arith.addf %242, %247 : vector<4x32xf32>
    %251 = arith.negf %250 : vector<4x32xf32>
    %252 = math.exp %251 : vector<4x32xf32>
    %cst_111 = arith.constant 1.000000e+00 : f32
    %253 = vector.broadcast %cst_111 : f32 to vector<4x32xf32>
    %254 = arith.addf %253, %252 : vector<4x32xf32>
    %255 = arith.divf %253, %254 : vector<4x32xf32>
    %256 = arith.addf %244, %248 : vector<4x32xf32>
    %257 = arith.negf %256 : vector<4x32xf32>
    %258 = math.exp %257 : vector<4x32xf32>
    %cst_112 = arith.constant 1.000000e+00 : f32
    %259 = vector.broadcast %cst_112 : f32 to vector<4x32xf32>
    %260 = arith.addf %259, %258 : vector<4x32xf32>
    %261 = arith.divf %259, %260 : vector<4x32xf32>
    %262 = arith.addf %249, %33 : vector<4x32xf32>
    %263 = arith.mulf %255, %262 : vector<4x32xf32>
    %264 = arith.addf %246, %263 : vector<4x32xf32>
    %265 = math.tanh %264 : vector<4x32xf32>
    %266 = arith.subf %234, %265 : vector<4x32xf32>
    %267 = arith.mulf %261, %266 : vector<4x32xf32>
    %268 = arith.addf %265, %267 : vector<4x32xf32>
    %269 = arith.index_cast %c6_i32 : i32 to index
    %c0_113 = arith.constant 0 : index
    %c0_114 = arith.constant 0 : index
    %270 = vector.load %arg6[%269, %c0_113, %c0_114] : memref<8x4x32xf32, #tpu.memory_space<vmem>>, vector<1x4x32xf32>
    %271 = vector.shape_cast %270 : vector<1x4x32xf32> to vector<4x32xf32>
    %272 = vector.shape_cast %268 : vector<4x32xf32> to vector<1x4x32xf32>
    tpu.vector_store %arg6[%269, %c0_113, %c0_114], %272 {strides = array<i32>} : memref<8x4x32xf32, #tpu.memory_space<vmem>>, vector<1x4x32xf32>,
    %c7_i32 = arith.constant 7 : i32
    %c4_i32_115 = arith.constant 4 : i32
    %273 = arith.muli %c7_i32, %c4_i32_115 : i32
    %274 = tpu.assume_multiple %273, 4 : i32
    %275 = arith.index_cast %274 : i32 to index
    %c0_116 = arith.constant 0 : index
    %276 = vector.load %arg8[%275, %c0_116] : memref<32x32xf32, #tpu.memory_space<vmem>>, vector<4x32xf32>
    %277 = arith.index_cast %274 : i32 to index
    %c0_117 = arith.constant 0 : index
    %278 = vector.load %arg9[%277, %c0_117] : memref<32x32xf32, #tpu.memory_space<vmem>>, vector<4x32xf32>
    %279 = arith.index_cast %274 : i32 to index
    %c0_118 = arith.constant 0 : index
    %280 = vector.load %arg10[%279, %c0_118] : memref<32x32xf32, #tpu.memory_space<vmem>>, vector<4x32xf32>
    %cst_119 = arith.constant dense<0.000000e+00> : vector<4x32xf32>
    %281 = tpu.matmul %268, %26, %cst_119 {dimension_numbers = #tpu.dot_dimension_numbers<[1], [0], [0], [1], [0, 0, 1, 1], [], []>} : vector<4x32xf32>, vector<32x32xf32>, vector<4x32xf32> -> vector<4x32xf32>
    %cst_120 = arith.constant dense<0.000000e+00> : vector<4x32xf32>
    %282 = tpu.matmul %268, %28, %cst_120 {dimension_numbers = #tpu.dot_dimension_numbers<[1], [0], [0], [1], [0, 0, 1, 1], [], []>} : vector<4x32xf32>, vector<32x32xf32>, vector<4x32xf32> -> vector<4x32xf32>
    %cst_121 = arith.constant dense<0.000000e+00> : vector<4x32xf32>
    %283 = tpu.matmul %268, %30, %cst_121 {dimension_numbers = #tpu.dot_dimension_numbers<[1], [0], [0], [1], [0, 0, 1, 1], [], []>} : vector<4x32xf32>, vector<32x32xf32>, vector<4x32xf32> -> vector<4x32xf32>
    %284 = arith.addf %276, %281 : vector<4x32xf32>
    %285 = arith.negf %284 : vector<4x32xf32>
    %286 = math.exp %285 : vector<4x32xf32>
    %cst_122 = arith.constant 1.000000e+00 : f32
    %287 = vector.broadcast %cst_122 : f32 to vector<4x32xf32>
    %288 = arith.addf %287, %286 : vector<4x32xf32>
    %289 = arith.divf %287, %288 : vector<4x32xf32>
    %290 = arith.addf %278, %282 : vector<4x32xf32>
    %291 = arith.negf %290 : vector<4x32xf32>
    %292 = math.exp %291 : vector<4x32xf32>
    %cst_123 = arith.constant 1.000000e+00 : f32
    %293 = vector.broadcast %cst_123 : f32 to vector<4x32xf32>
    %294 = arith.addf %293, %292 : vector<4x32xf32>
    %295 = arith.divf %293, %294 : vector<4x32xf32>
    %296 = arith.addf %283, %33 : vector<4x32xf32>
    %297 = arith.mulf %289, %296 : vector<4x32xf32>
    %298 = arith.addf %280, %297 : vector<4x32xf32>
    %299 = math.tanh %298 : vector<4x32xf32>
    %300 = arith.subf %268, %299 : vector<4x32xf32>
    %301 = arith.mulf %295, %300 : vector<4x32xf32>
    %302 = arith.addf %299, %301 : vector<4x32xf32>
    %303 = arith.index_cast %c7_i32 : i32 to index
    %c0_124 = arith.constant 0 : index
    %c0_125 = arith.constant 0 : index
    %304 = vector.load %arg6[%303, %c0_124, %c0_125] : memref<8x4x32xf32, #tpu.memory_space<vmem>>, vector<1x4x32xf32>
    %305 = vector.shape_cast %304 : vector<1x4x32xf32> to vector<4x32xf32>
    %306 = vector.shape_cast %302 : vector<4x32xf32> to vector<1x4x32xf32>
    tpu.vector_store %arg6[%303, %c0_124, %c0_125], %306 {strides = array<i32>} : memref<8x4x32xf32, #tpu.memory_space<vmem>>, vector<1x4x32xf32>,
    %c8_i32 = arith.constant 8 : i32
    %c0_126 = arith.constant 0 : index
    %c0_127 = arith.constant 0 : index
    %307 = vector.load %arg7[%c0_126, %c0_127] : memref<4x32xf32, #tpu.memory_space<vmem>>, vector<4x32xf32>
    tpu.vector_store %arg7[%c0_126, %c0_127], %302 {strides = array<i32>} : memref<4x32xf32, #tpu.memory_space<vmem>>, vector<4x32xf32>,
    return
  }
}

</mosaic_0001>

<llo_original>
// kernel: tpu_custom_call.1
$region0: #{tpu_custom_call.1}
  #allocation0 [shape = 'u32[]', space=smem, size = 0x4, offset = 0x4, fixed_abs, tag = 'smem constant byte address 0x4 - core index']
  #allocation1 [shape = 'u32[144,128]{1,0:T(1,128)}', space=vmem, size = 0x12000, scoped, tag = 'internal scratch']
  #allocation2 [shape = 'f32[32,32]{1,0:T(8,128)}', space=vmem, size = 0x4000, scoped, tag = 'scratch operand']
  #allocation3 [shape = 'f32[32,32]{1,0:T(8,128)}', space=vmem, size = 0x4000, scoped, tag = 'scratch operand']
  #allocation4 [shape = 'f32[32,32]{1,0:T(8,128)}', space=vmem, size = 0x4000, scoped, tag = 'scratch operand']
  %s0 = inlined_call_operand.vmem [shape: f32[32,16], index: 0, kind: input, shape index: {}]
  %s1 = inlined_call_operand.vmem [shape: f32[3,16,32], index: 1, kind: input, shape index: {}]
  %s2 = inlined_call_operand.hbm [shape: f32[3,32,32], index: 2, kind: input, shape index: {}]
  %s3 = inlined_call_operand.hbm [shape: f32[3,1,32], index: 3, kind: input, shape index: {}]
  %s4 = inlined_call_operand.vmem [shape: f32[1,32], index: 4, kind: input, shape index: {}]
  %s5 = inlined_call_operand.vmem [shape: f32[4,32], index: 5, kind: input, shape index: {}]
  %s6 = inlined_call_operand.hbm [shape: f32[8,4,32], index: 6, kind: output, shape index: {0}]
  %s7 = inlined_call_operand.hbm [shape: f32[4,32], index: 7, kind: output, shape index: {1}]
  %8 = xla_tuple %s6, %s7
  %s9 = sld [smem:[#allocation0]]
  $region50: #{tpu_custom_call.1} parent=0
    _
  %s11 = ssub.s32 1, %s9
  %s12 = scalar_select 0, %s11, %s9
  $region1: #{tpu_custom_call.1} parent=0
    #allocation5 [shape = 'u8[49152]{0}', space=vmem, size = 0xc000, scoped, tag = 'input window, operand 2, single buffered']
    #allocation6 [shape = 's32[1]{0}', space=sflag, size = 0x4, scoped, tag = 'scoped memory for tpu_custom_call.1']
    #allocation7 [shape = 's32[1]{0}', space=sflag, size = 0x4, scoped, tag = 'scoped memory for tpu_custom_call.1']
    #allocation8 [shape = 'u8[1536]{0}', space=vmem, size = 0x800, scoped, tag = 'input window, operand 3, single buffered']
    #allocation9 [shape = 's32[1]{0}', space=sflag, size = 0x4, scoped, tag = 'scoped memory for tpu_custom_call.1']
    #allocation10 [shape = 'u8[16384]{0}', space=vmem, size = 0x4000, scoped, tag = 'output window, operand 0, single buffered']
    #allocation11 [shape = 'u8[2048]{0}', space=vmem, size = 0x800, scoped, tag = 'output window, operand 1, single buffered']
    #allocation12 [shape = 's32[1]{0}', space=sflag, size = 0x4, scoped, tag = 'scoped memory for tpu_custom_call.1']
    %13 = vsyncpa [#allocation6], 0
    %14 = vsyncpa [#allocation9], 0
    %15 = vsyncpa [#allocation7], 0
    %16 = vsyncpa [#allocation12], 0
    // Predicated region
    $region2: #{tpu_custom_call.1} parent=1 // pred_check
      _
    $region3: #{tpu_custom_call.1} parent=1 // pred_check_branch
      %18 = sbr.rel (0) target = $region5
    $region4: #{tpu_custom_call.1} parent=1 // pred_region
      _
    $region5: #{tpu_custom_call.1} parent=1 // pred_fallthru
      _
    // Predicated region
    $region6: #{tpu_custom_call.1} parent=1 // pred_check
      _
    $region7: #{tpu_custom_call.1} parent=1 // pred_check_branch
      %20 = sbr.rel (0) target = $region9
    $region8: #{tpu_custom_call.1} parent=1 // pred_region
      _
    $region9: #{tpu_custom_call.1} parent=1 // pred_fallthru
      _
    // Predicated region
    $region10: #{tpu_custom_call.1} parent=1 // pred_check
      _
    $region11: #{tpu_custom_call.1} parent=1 // pred_check_branch
      %22 = sbr.rel (0) target = $region13
    $region12: #{tpu_custom_call.1} parent=1 // pred_region
      %s24 = ssub.s32 1536, 1536
      %25 = vsyncadd [#allocation6], %s24
      %s26 = sshll.u32 [#allocation5], 4
      %s27 = int_to_ptr.vmem [resolvable:$true] %s26
      %32 = dma.hbm_to_vmem [thread:$0]  %s2, 1536, %s27, [#allocation6], 128, 128, 8
    $region13: #{tpu_custom_call.1} parent=1 // pred_fallthru
      _
    // Predicated region
    $region14: #{tpu_custom_call.1} parent=1 // pred_check
      _
    $region15: #{tpu_custom_call.1} parent=1 // pred_check_branch
      %34 = sbr.rel (0) target = $region17
    $region16: #{tpu_custom_call.1} parent=1 // pred_region
      %s36 = ssub.s32 48, 48
      %37 = vsyncadd [#allocation9], %s36
      %s38 = sshll.u32 [#allocation8], 4
      %s39 = int_to_ptr.vmem [resolvable:$true] %s38
      %44 = dma.hbm_to_vmem [thread:$0]  %s3, 48, %s39, [#allocation9], 16, 16, 1
    $region17: #{tpu_custom_call.1} parent=1 // pred_fallthru
      _
    // Predicated region
    $region18: #{tpu_custom_call.1} parent=1 // pred_check
      _
    $region19: #{tpu_custom_call.1} parent=1 // pred_check_branch
      %46 = sbr.rel (0) target = $region21
    $region20: #{tpu_custom_call.1} parent=1 // pred_region
      _
    $region21: #{tpu_custom_call.1} parent=1 // pred_fallthru
      _
    // Predicated region
    $region22: #{tpu_custom_call.1} parent=1 // pred_check
      _
    $region23: #{tpu_custom_call.1} parent=1 // pred_check_branch
      %48 = sbr.rel (0) target = $region25
    $region24: #{tpu_custom_call.1} parent=1 // pred_region
      _
    $region25: #{tpu_custom_call.1} parent=1 // pred_fallthru
      _
    // Predicated region
    $region26: #{tpu_custom_call.1} parent=1 // pred_check
      _
    $region27: #{tpu_custom_call.1} parent=1 // pred_check_branch
      %50 = sbr.rel (0) target = $region29
    $region28: #{tpu_custom_call.1} parent=1 // pred_region
      %51 = dma.done [#allocation6], 1536
    $region29: #{tpu_custom_call.1} parent=1 // pred_fallthru
      _
    // Predicated region
    $region30: #{tpu_custom_call.1} parent=1 // pred_check
      _
    $region31: #{tpu_custom_call.1} parent=1 // pred_check_branch
      %53 = sbr.rel (0) target = $region33
    $region32: #{tpu_custom_call.1} parent=1 // pred_region
      %54 = dma.done [#allocation9], 48
    $region33: #{tpu_custom_call.1} parent=1 // pred_fallthru
      _
    %v55 = vld [vmem:[%s0] sm:$0xff]
    %v56 = vld [vmem:[%s0 + $0x8] sm:$0xff]
    %v57 = vld [vmem:[%s0 + $0x10] sm:$0xff]
    %v58 = vld [vmem:[%s0 + $0x18] sm:$0xff]
    %v59 = vld [vmem:[%s1] sm:$0xff]
    %v60 = vld [vmem:[%s1 + $0x8] sm:$0xff]
    %v61 = vld [vmem:[#allocation8] sm:$0x1]
    %v63 = vlaneseq
    %v64 = vshrl.u32 %v63, 7
    %v65 = vsub.s32 0, %v64
    %v66 = vrot.slane %v61, %v65
    %vm68 = vcmask 130048
    %v70 = vsel %vm68, %v55, 0
    %v73 = vsel %vm68, %v56, 0
    %v76 = vsel %vm68, %v57, 0
    %v79 = vsel %vm68, %v58, 0
    %81 = vmatprep.subr.mxu0 0.0
    %82 = vmatpush1.msra.mxu0 0.0
    %83 = vmatprep.subr.mxu0 0.0
    %84 = vmatpush1.msra.mxu0 0.0
    %85 = vmatprep.subr.mxu0 0.0
    %86 = vmatpush1.msra.mxu0 0.0
    %87 = vmatprep.subr.mxu0 0.0
    %88 = vmatpush1.msra.mxu0 0.0
    %89 = vmatprep.subr.mxu0 0.0
    %90 = vmatpush1.msra.mxu0 0.0
    %91 = vmatprep.subr.mxu0 0.0
    %92 = vmatpush1.msra.mxu0 0.0
    %93 = vmatprep.subr.mxu0 0.0
    %94 = vmatpush1.msra.mxu0 0.0
    %95 = vmatprep.subr.mxu0 0.0
    %96 = vmatpush1.msra.mxu0 0.0
    %97 = vmatprep.subr.mxu0 0.0
    %98 = vmatpush1.msra.mxu0 0.0
    %99 = vmatprep.subr.mxu0 0.0
    %100 = vmatpush1.msra.mxu0 0.0
    %101 = vmatprep.subr.mxu0 0.0
    %102 = vmatpush1.msra.mxu0 0.0
    %103 = vmatprep.subr.mxu0 0.0
    %104 = vmatpush1.msra.mxu0 0.0
    %105 = vmatprep.subr.mxu0 0.0
    %106 = vmatpush1.msra.mxu0 0.0
    %107 = vmatprep.subr.mxu0 0.0
    %108 = vmatpush1.msra.mxu0 0.0
    %109 = vmatprep.subr.mxu0 0.0
    %110 = vmatpush1.msra.mxu0 %v60
    %111 = vmatprep.subr.mxu0 0.0
    %112 = vmatpush1.msra.mxu0 %v59
    %113 = vmatprep.subr.mxu0 0.0
    %114 = vmatpush2.msra.mxu0 0.0
    %115 = vmatprep.subr.mxu0 0.0
    %116 = vmatpush2.msra.mxu0 0.0
    %117 = vmatprep.subr.mxu0 0.0
    %118 = vmatpush2.msra.mxu0 0.0
    %119 = vmatprep.subr.mxu0 0.0
    %120 = vmatpush2.msra.mxu0 0.0
    %121 = vmatprep.subr.mxu0 0.0
    %122 = vmatpush2.msra.mxu0 0.0
    %123 = vmatprep.subr.mxu0 0.0
    %124 = vmatpush2.msra.mxu0 0.0
    %125 = vmatprep.subr.mxu0 0.0
    %126 = vmatpush2.msra.mxu0 0.0
    %127 = vmatprep.subr.mxu0 0.0
    %128 = vmatpush2.msra.mxu0 0.0
    %129 = vmatprep.subr.mxu0 0.0
    %130 = vmatpush2.msra.mxu0 0.0
    %131 = vmatprep.subr.mxu0 0.0
    %132 = vmatpush2.msra.mxu0 0.0
    %133 = vmatprep.subr.mxu0 0.0
    %134 = vmatpush2.msra.mxu0 0.0
    %135 = vmatprep.subr.mxu0 0.0
    %136 = vmatpush2.msra.mxu0 0.0
    %137 = vmatprep.subr.mxu0 0.0
    %138 = vmatpush2.msra.mxu0 0.0
    %139 = vmatprep.subr.mxu0 0.0
    %140 = vmatpush2.msra.mxu0 0.0
    %141 = vmatprep.subr.mxu0 0.0
    %142 = vmatpush2.msra.mxu0 0.0
    %143 = vmatprep.subr.mxu0 0.0
    %144 = vmatpush2.msra.mxu0 0.0
    %145 = vmatprep.mubr.f32.mxu0 0.0
    %146 = vmatmul.mubr.f32.gmra.mxu0 %v70
    %v147 = vpop.f32.mrf.mxu0
    %v148 = vadd.f32 %v66, %v147
    %v149 = vpop.f32.mrf.mxu0
    %150 = vmatprep.mubr.f32.mxu0 0.0
    %151 = vmatmul.mubr.f32.gmra.mxu0 %v73
    %v152 = vpop.f32.mrf.mxu0
    %v153 = vadd.f32 %v66, %v152
    %v154 = vpop.f32.mrf.mxu0
    %155 = vmatprep.mubr.f32.mxu0 0.0
    %156 = vmatmul.mubr.f32.gmra.mxu0 %v76
    %v157 = vpop.f32.mrf.mxu0
    %v158 = vadd.f32 %v66, %v157
    %v159 = vpop.f32.mrf.mxu0
    %160 = vmatprep.mubr.f32.mxu0 0.0
    %161 = vmatmul.mubr.f32.gmra.mxu0 %v79
    %v162 = vpop.f32.mrf.mxu0
    %v163 = vadd.f32 %v66, %v162
    %v164 = vpop.f32.mrf.mxu0
    %165 = vdwg.mxu0
    %vm166 = vcmask 261120
    %167 = vst.msk [vmem:[#allocation2] sm:$0xff] %vm166, %v148
    %168 = vst.msk [vmem:[#allocation2 + $0x8] sm:$0xff] %vm166, %v153
    %169 = vst.msk [vmem:[#allocation2 + $0x10] sm:$0xff] %vm166, %v158
    %170 = vst.msk [vmem:[#allocation2 + $0x18] sm:$0xff] %vm166, %v163
    %s171 = scalar_lea.vmem %s1, 16
    %v172 = vld [vmem:[%s171] sm:$0xff]
    %v173 = vld [vmem:[%s171 + $0x8] sm:$0xff]
    %s174 = scalar_lea.vmem [#allocation8], 1
    %v175 = vld [vmem:[%s174] sm:$0x1]
    %v177 = vlaneseq
    %v178 = vshrl.u32 %v177, 7
    %v179 = vsub.s32 0, %v178
    %v180 = vrot.slane %v175, %v179
    %182 = vmatprep.subr.mxu0 0.0
    %183 = vmatpush1.msra.mxu0 0.0
    %184 = vmatprep.subr.mxu0 0.0
    %185 = vmatpush1.msra.mxu0 0.0
    %186 = vmatprep.subr.mxu0 0.0
    %187 = vmatpush1.msra.mxu0 0.0
    %188 = vmatprep.subr.mxu0 0.0
    %189 = vmatpush1.msra.mxu0 0.0
    %190 = vmatprep.subr.mxu0 0.0
    %191 = vmatpush1.msra.mxu0 0.0
    %192 = vmatprep.subr.mxu0 0.0
    %193 = vmatpush1.msra.mxu0 0.0
    %194 = vmatprep.subr.mxu0 0.0
    %195 = vmatpush1.msra.mxu0 0.0
    %196 = vmatprep.subr.mxu0 0.0
    %197 = vmatpush1.msra.mxu0 0.0
    %198 = vmatprep.subr.mxu0 0.0
    %199 = vmatpush1.msra.mxu0 0.0
    %200 = vmatprep.subr.mxu0 0.0
    %201 = vmatpush1.msra.mxu0 0.0
    %202 = vmatprep.subr.mxu0 0.0
    %203 = vmatpush1.msra.mxu0 0.0
    %204 = vmatprep.subr.mxu0 0.0
    %205 = vmatpush1.msra.mxu0 0.0
    %206 = vmatprep.subr.mxu0 0.0
    %207 = vmatpush1.msra.mxu0 0.0
    %208 = vmatprep.subr.mxu0 0.0
    %209 = vmatpush1.msra.mxu0 0.0
    %210 = vmatprep.subr.mxu0 0.0
    %211 = vmatpush1.msra.mxu0 %v173
    %212 = vmatprep.subr.mxu0 0.0
    %213 = vmatpush1.msra.mxu0 %v172
    %214 = vmatprep.subr.mxu0 0.0
    %215 = vmatpush2.msra.mxu0 0.0
    %216 = vmatprep.subr.mxu0 0.0
    %217 = vmatpush2.msra.mxu0 0.0
    %218 = vmatprep.subr.mxu0 0.0
    %219 = vmatpush2.msra.mxu0 0.0
    %220 = vmatprep.subr.mxu0 0.0
    %221 = vmatpush2.msra.mxu0 0.0
    %222 = vmatprep.subr.mxu0 0.0
    %223 = vmatpush2.msra.mxu0 0.0
    %224 = vmatprep.subr.mxu0 0.0
    %225 = vmatpush2.msra.mxu0 0.0
    %226 = vmatprep.subr.mxu0 0.0
    %227 = vmatpush2.msra.mxu0 0.0
    %228 = vmatprep.subr.mxu0 0.0
    %229 = vmatpush2.msra.mxu0 0.0
    %230 = vmatprep.subr.mxu0 0.0
    %231 = vmatpush2.msra.mxu0 0.0
    %232 = vmatprep.subr.mxu0 0.0
    %233 = vmatpush2.msra.mxu0 0.0
    %234 = vmatprep.subr.mxu0 0.0
    %235 = vmatpush2.msra.mxu0 0.0
    %236 = vmatprep.subr.mxu0 0.0
    %237 = vmatpush2.msra.mxu0 0.0
    %238 = vmatprep.subr.mxu0 0.0
    %239 = vmatpush2.msra.mxu0 0.0
    %240 = vmatprep.subr.mxu0 0.0
    %241 = vmatpush2.msra.mxu0 0.0
    %242 = vmatprep.subr.mxu0 0.0
    %243 = vmatpush2.msra.mxu0 0.0
    %244 = vmatprep.subr.mxu0 0.0
    %245 = vmatpush2.msra.mxu0 0.0
    %246 = vmatprep.mubr.f32.mxu0 0.0
    %247 = vmatmul.mubr.f32.gmra.mxu0 %v70
    %v248 = vpop.f32.mrf.mxu0
    %v249 = vadd.f32 %v180, %v248
    %v250 = vpop.f32.mrf.mxu0
    %251 = vmatprep.mubr.f32.mxu0 0.0
    %252 = vmatmul.mubr.f32.gmra.mxu0 %v73
    %v253 = vpop.f32.mrf.mxu0
    %v254 = vadd.f32 %v180, %v253
    %v255 = vpop.f32.mrf.mxu0
    %256 = vmatprep.mubr.f32.mxu0 0.0
    %257 = vmatmul.mubr.f32.gmra.mxu0 %v76
    %v258 = vpop.f32.mrf.mxu0
    %v259 = vadd.f32 %v180, %v258
    %v260 = vpop.f32.mrf.mxu0
    %261 = vmatprep.mubr.f32.mxu0 0.0
    %262 = vmatmul.mubr.f32.gmra.mxu0 %v79
    %v263 = vpop.f32.mrf.mxu0
    %v264 = vadd.f32 %v180, %v263
    %v265 = vpop.f32.mrf.mxu0
    %266 = vdwg.mxu0
    %267 = vst.msk [vmem:[#allocation3] sm:$0xff] %vm166, %v249
    %268 = vst.msk [vmem:[#allocation3 + $0x8] sm:$0xff] %vm166, %v254
    %269 = vst.msk [vmem:[#allocation3 + $0x10] sm:$0xff] %vm166, %v259
    %270 = vst.msk [vmem:[#allocation3 + $0x18] sm:$0xff] %vm166, %v264
    %s271 = scalar_lea.vmem %s1, 32
    %v272 = vld [vmem:[%s271] sm:$0xff]
    %v273 = vld [vmem:[%s271 + $0x8] sm:$0xff]
    %s274 = scalar_lea.vmem [#allocation8], 2
    %v275 = vld [vmem:[%s274] sm:$0x1]
    %v277 = vlaneseq
    %v278 = vshrl.u32 %v277, 7
    %v279 = vsub.s32 0, %v278
    %v280 = vrot.slane %v275, %v279
    %282 = vmatprep.subr.mxu0 0.0
    %283 = vmatpush1.msra.mxu0 0.0
    %284 = vmatprep.subr.mxu0 0.0
    %285 = vmatpush1.msra.mxu0 0.0
    %286 = vmatprep.subr.mxu0 0.0
    %287 = vmatpush1.msra.mxu0 0.0
    %288 = vmatprep.subr.mxu0 0.0
    %289 = vmatpush1.msra.mxu0 0.0
    %290 = vmatprep.subr.mxu0 0.0
    %291 = vmatpush1.msra.mxu0 0.0
    %292 = vmatprep.subr.mxu0 0.0
    %293 = vmatpush1.msra.mxu0 0.0
    %294 = vmatprep.subr.mxu0 0.0
    %295 = vmatpush1.msra.mxu0 0.0
    %296 = vmatprep.subr.mxu0 0.0
    %297 = vmatpush1.msra.mxu0 0.0
    %298 = vmatprep.subr.mxu0 0.0
    %299 = vmatpush1.msra.mxu0 0.0
    %300 = vmatprep.subr.mxu0 0.0
    %301 = vmatpush1.msra.mxu0 0.0
    %302 = vmatprep.subr.mxu0 0.0
    %303 = vmatpush1.msra.mxu0 0.0
    %304 = vmatprep.subr.mxu0 0.0
    %305 = vmatpush1.msra.mxu0 0.0
    %306 = vmatprep.subr.mxu0 0.0
    %307 = vmatpush1.msra.mxu0 0.0
    %308 = vmatprep.subr.mxu0 0.0
    %309 = vmatpush1.msra.mxu0 0.0
    %310 = vmatprep.subr.mxu0 0.0
    %311 = vmatpush1.msra.mxu0 %v273
    %312 = vmatprep.subr.mxu0 0.0
    %313 = vmatpush1.msra.mxu0 %v272
    %314 = vmatprep.subr.mxu0 0.0
    %315 = vmatpush2.msra.mxu0 0.0
    %316 = vmatprep.subr.mxu0 0.0
    %317 = vmatpush2.msra.mxu0 0.0
    %318 = vmatprep.subr.mxu0 0.0
    %319 = vmatpush2.msra.mxu0 0.0
    %320 = vmatprep.subr.mxu0 0.0
    %321 = vmatpush2.msra.mxu0 0.0
    %322 = vmatprep.subr.mxu0 0.0
    %323 = vmatpush2.msra.mxu0 0.0
    %324 = vmatprep.subr.mxu0 0.0
    %325 = vmatpush2.msra.mxu0 0.0
    %326 = vmatprep.subr.mxu0 0.0
    %327 = vmatpush2.msra.mxu0 0.0
    %328 = vmatprep.subr.mxu0 0.0
    %329 = vmatpush2.msra.mxu0 0.0
    %330 = vmatprep.subr.mxu0 0.0
    %331 = vmatpush2.msra.mxu0 0.0
    %332 = vmatprep.subr.mxu0 0.0
    %333 = vmatpush2.msra.mxu0 0.0
    %334 = vmatprep.subr.mxu0 0.0
    %335 = vmatpush2.msra.mxu0 0.0
    %336 = vmatprep.subr.mxu0 0.0
    %337 = vmatpush2.msra.mxu0 0.0
    %338 = vmatprep.subr.mxu0 0.0
    %339 = vmatpush2.msra.mxu0 0.0
    %340 = vmatprep.subr.mxu0 0.0
    %341 = vmatpush2.msra.mxu0 0.0
    %342 = vmatprep.subr.mxu0 0.0
    %343 = vmatpush2.msra.mxu0 0.0
    %344 = vmatprep.subr.mxu0 0.0
    %345 = vmatpush2.msra.mxu0 0.0
    %346 = vmatprep.mubr.f32.mxu0 0.0
    %347 = vmatmul.mubr.f32.gmra.mxu0 %v70
    %v348 = vpop.f32.mrf.mxu0
    %v349 = vadd.f32 %v280, %v348
    %v350 = vpop.f32.mrf.mxu0
    %351 = vmatprep.mubr.f32.mxu0 0.0
    %352 = vmatmul.mubr.f32.gmra.mxu0 %v73
    %v353 = vpop.f32.mrf.mxu0
    %v354 = vadd.f32 %v280, %v353
    %v355 = vpop.f32.mrf.mxu0
    %356 = vmatprep.mubr.f32.mxu0 0.0
    %357 = vmatmul.mubr.f32.gmra.mxu0 %v76
    %v358 = vpop.f32.mrf.mxu0
    %v359 = vadd.f32 %v280, %v358
    %v360 = vpop.f32.mrf.mxu0
    %361 = vmatprep.mubr.f32.mxu0 0.0
    %362 = vmatmul.mubr.f32.gmra.mxu0 %v79
    %v363 = vpop.f32.mrf.mxu0
    %v364 = vadd.f32 %v280, %v363
    %v365 = vpop.f32.mrf.mxu0
    %366 = vdwg.mxu0
    %367 = vst.msk [vmem:[#allocation4] sm:$0xff] %vm166, %v349
    %368 = vst.msk [vmem:[#allocation4 + $0x8] sm:$0xff] %vm166, %v354
    %369 = vst.msk [vmem:[#allocation4 + $0x10] sm:$0xff] %vm166, %v359
    %370 = vst.msk [vmem:[#allocation4 + $0x18] sm:$0xff] %vm166, %v364
    %v371 = vld [vmem:[#allocation5] sm:$0xff]
    %v372 = vld [vmem:[#allocation5 + $0x8] sm:$0xff]
    %v373 = vld [vmem:[#allocation5 + $0x10] sm:$0xff]
    %v374 = vld [vmem:[#allocation5 + $0x18] sm:$0xff]
    %s375 = scalar_lea.vmem [#allocation5], 32
    %v376 = vld [vmem:[%s375] sm:$0xff]
    %v377 = vld [vmem:[%s375 + $0x8] sm:$0xff]
    %v378 = vld [vmem:[%s375 + $0x10] sm:$0xff]
    %v379 = vld [vmem:[%s375 + $0x18] sm:$0xff]
    %s380 = scalar_lea.vmem [#allocation5], 64
    %v381 = vld [vmem:[%s380] sm:$0xff]
    %v382 = vld [vmem:[%s380 + $0x8] sm:$0xff]
    %v383 = vld [vmem:[%s380 + $0x10] sm:$0xff]
    %v384 = vld [vmem:[%s380 + $0x18] sm:$0xff]
    %v385 = vld [vmem:[%s4] sm:$0x1]
    %v387 = vlaneseq
    %v388 = vshrl.u32 %v387, 7
    %v389 = vsub.s32 0, %v388
    %v390 = vrot.slane %v385, %v389
    %v392 = vld [vmem:[%s5] sm:$0xf]
    %v393 = vld [vmem:[#allocation2] sm:$0xf]
    %v394 = vld [vmem:[#allocation3] sm:$0xf]
    %v395 = vld [vmem:[#allocation4] sm:$0xf]
    %v397 = vsel %vm166, %v392, 0
    %399 = vmatprep.subr.mxu0 0.0
    %400 = vmatpush1.msra.mxu0 0.0
    %401 = vmatprep.subr.mxu0 0.0
    %402 = vmatpush1.msra.mxu0 0.0
    %403 = vmatprep.subr.mxu0 0.0
    %404 = vmatpush1.msra.mxu0 0.0
    %405 = vmatprep.subr.mxu0 0.0
    %406 = vmatpush1.msra.mxu0 0.0
    %407 = vmatprep.subr.mxu0 0.0
    %408 = vmatpush1.msra.mxu0 0.0
    %409 = vmatprep.subr.mxu0 0.0
    %410 = vmatpush1.msra.mxu0 0.0
    %411 = vmatprep.subr.mxu0 0.0
    %412 = vmatpush1.msra.mxu0 0.0
    %413 = vmatprep.subr.mxu0 0.0
    %414 = vmatpush1.msra.mxu0 0.0
    %415 = vmatprep.subr.mxu0 0.0
    %416 = vmatpush1.msra.mxu0 0.0
    %417 = vmatprep.subr.mxu0 0.0
    %418 = vmatpush1.msra.mxu0 0.0
    %419 = vmatprep.subr.mxu0 0.0
    %420 = vmatpush1.msra.mxu0 0.0
    %421 = vmatprep.subr.mxu0 0.0
    %422 = vmatpush1.msra.mxu0 0.0
    %423 = vmatprep.subr.mxu0 0.0
    %424 = vmatpush1.msra.mxu0 %v374
    %425 = vmatprep.subr.mxu0 0.0
    %426 = vmatpush1.msra.mxu0 %v373
    %427 = vmatprep.subr.mxu0 0.0
    %428 = vmatpush1.msra.mxu0 %v372
    %429 = vmatprep.subr.mxu0 0.0
    %430 = vmatpush1.msra.mxu0 %v371
    %431 = vmatprep.subr.mxu0 0.0
    %432 = vmatpush2.msra.mxu0 0.0
    %433 = vmatprep.subr.mxu0 0.0
    %434 = vmatpush2.msra.mxu0 0.0
    %435 = vmatprep.subr.mxu0 0.0
    %436 = vmatpush2.msra.mxu0 0.0
    %437 = vmatprep.subr.mxu0 0.0
    %438 = vmatpush2.msra.mxu0 0.0
    %439 = vmatprep.subr.mxu0 0.0
    %440 = vmatpush2.msra.mxu0 0.0
    %441 = vmatprep.subr.mxu0 0.0
    %442 = vmatpush2.msra.mxu0 0.0
    %443 = vmatprep.subr.mxu0 0.0
    %444 = vmatpush2.msra.mxu0 0.0
    %445 = vmatprep.subr.mxu0 0.0
    %446 = vmatpush2.msra.mxu0 0.0
    %447 = vmatprep.subr.mxu0 0.0
    %448 = vmatpush2.msra.mxu0 0.0
    %449 = vmatprep.subr.mxu0 0.0
    %450 = vmatpush2.msra.mxu0 0.0
    %451 = vmatprep.subr.mxu0 0.0
    %452 = vmatpush2.msra.mxu0 0.0
    %453 = vmatprep.subr.mxu0 0.0
    %454 = vmatpush2.msra.mxu0 0.0
    %455 = vmatprep.subr.mxu0 0.0
    %456 = vmatpush2.msra.mxu0 0.0
    %457 = vmatprep.subr.mxu0 0.0
    %458 = vmatpush2.msra.mxu0 0.0
    %459 = vmatprep.subr.mxu0 0.0
    %460 = vmatpush2.msra.mxu0 0.0
    %461 = vmatprep.subr.mxu0 0.0
    %462 = vmatpush2.msra.mxu0 0.0
    %463 = vmatprep.mubr.f32.mxu0 0.0
    %464 = vmatmul.mubr.f32.gmra.mxu0 %v397
    %v465 = vpop.f32.mrf.mxu0
    %v466 = vadd.f32 0.0, %v465
    %v467 = vpop.f32.mrf.mxu0
    %468 = vdwg.mxu0
    %469 = vmatprep.subr.mxu0 0.0
    %470 = vmatpush1.msra.mxu0 0.0
    %471 = vmatprep.subr.mxu0 0.0
    %472 = vmatpush1.msra.mxu0 0.0
    %473 = vmatprep.subr.mxu0 0.0
    %474 = vmatpush1.msra.mxu0 0.0
    %475 = vmatprep.subr.mxu0 0.0
    %476 = vmatpush1.msra.mxu0 0.0
    %477 = vmatprep.subr.mxu0 0.0
    %478 = vmatpush1.msra.mxu0 0.0
    %479 = vmatprep.subr.mxu0 0.0
    %480 = vmatpush1.msra.mxu0 0.0
    %481 = vmatprep.subr.mxu0 0.0
    %482 = vmatpush1.msra.mxu0 0.0
    %483 = vmatprep.subr.mxu0 0.0
    %484 = vmatpush1.msra.mxu0 0.0
    %485 = vmatprep.subr.mxu0 0.0
    %486 = vmatpush1.msra.mxu0 0.0
    %487 = vmatprep.subr.mxu0 0.0
    %488 = vmatpush1.msra.mxu0 0.0
    %489 = vmatprep.subr.mxu0 0.0
    %490 = vmatpush1.msra.mxu0 0.0
    %491 = vmatprep.subr.mxu0 0.0
    %492 = vmatpush1.msra.mxu0 0.0
    %493 = vmatprep.subr.mxu0 0.0
    %494 = vmatpush1.msra.mxu0 %v379
    %495 = vmatprep.subr.mxu0 0.0
    %496 = vmatpush1.msra.mxu0 %v378
    %497 = vmatprep.subr.mxu0 0.0
    %498 = vmatpush1.msra.mxu0 %v377
    %499 = vmatprep.subr.mxu0 0.0
    %500 = vmatpush1.msra.mxu0 %v376
    %501 = vmatprep.subr.mxu0 0.0
    %502 = vmatpush2.msra.mxu0 0.0
    %503 = vmatprep.subr.mxu0 0.0
    %504 = vmatpush2.msra.mxu0 0.0
    %505 = vmatprep.subr.mxu0 0.0
    %506 = vmatpush2.msra.mxu0 0.0
    %507 = vmatprep.subr.mxu0 0.0
    %508 = vmatpush2.msra.mxu0 0.0
    %509 = vmatprep.subr.mxu0 0.0
    %510 = vmatpush2.msra.mxu0 0.0
    %511 = vmatprep.subr.mxu0 0.0
    %512 = vmatpush2.msra.mxu0 0.0
    %513 = vmatprep.subr.mxu0 0.0
    %514 = vmatpush2.msra.mxu0 0.0
    %515 = vmatprep.subr.mxu0 0.0
    %516 = vmatpush2.msra.mxu0 0.0
    %517 = vmatprep.subr.mxu0 0.0
    %518 = vmatpush2.msra.mxu0 0.0
    %519 = vmatprep.subr.mxu0 0.0
    %520 = vmatpush2.msra.mxu0 0.0
    %521 = vmatprep.subr.mxu0 0.0
    %522 = vmatpush2.msra.mxu0 0.0
    %523 = vmatprep.subr.mxu0 0.0
    %524 = vmatpush2.msra.mxu0 0.0
    %525 = vmatprep.subr.mxu0 0.0
    %526 = vmatpush2.msra.mxu0 0.0
    %527 = vmatprep.subr.mxu0 0.0
    %528 = vmatpush2.msra.mxu0 0.0
    %529 = vmatprep.subr.mxu0 0.0
    %530 = vmatpush2.msra.mxu0 0.0
    %531 = vmatprep.subr.mxu0 0.0
    %532 = vmatpush2.msra.mxu0 0.0
    %533 = vmatprep.mubr.f32.mxu0 0.0
    %534 = vmatmul.mubr.f32.gmra.mxu0 %v397
    %v535 = vpop.f32.mrf.mxu0
    %v536 = vadd.f32 0.0, %v535
    %v537 = vpop.f32.mrf.mxu0
    %538 = vdwg.mxu0
    %v539 = vadd.f32 %v393, %v466
    %v540 = vxor.u32 %v539, 2147483648
    %v541 = vmul.f32 %v540, 1.442695
    %v542 = vpow.pop %v541
    %v543 = vadd.f32 %v542, 1.0
    %v544 = vrcp.pop %v543
    %v545 = vmul.f32 1.0, %v544
    %v546 = vadd.f32 %v394, %v536
    %v547 = vxor.u32 %v546, 2147483648
    %v548 = vmul.f32 %v547, 1.442695
    %v549 = vpow.pop %v548
    %v550 = vadd.f32 %v549, 1.0
    %v551 = vrcp.pop %v550
    %v552 = vmul.f32 1.0, %v551
    %553 = vmatprep.subr.mxu0 0.0
    %554 = vmatpush1.msra.mxu0 0.0
    %555 = vmatprep.subr.mxu0 0.0
    %556 = vmatpush1.msra.mxu0 0.0
    %557 = vmatprep.subr.mxu0 0.0
    %558 = vmatpush1.msra.mxu0 0.0
    %559 = vmatprep.subr.mxu0 0.0
    %560 = vmatpush1.msra.mxu0 0.0
    %561 = vmatprep.subr.mxu0 0.0
    %562 = vmatpush1.msra.mxu0 0.0
    %563 = vmatprep.subr.mxu0 0.0
    %564 = vmatpush1.msra.mxu0 0.0
    %565 = vmatprep.subr.mxu0 0.0
    %566 = vmatpush1.msra.mxu0 0.0
    %567 = vmatprep.subr.mxu0 0.0
    %568 = vmatpush1.msra.mxu0 0.0
    %569 = vmatprep.subr.mxu0 0.0
    %570 = vmatpush1.msra.mxu0 0.0
    %571 = vmatprep.subr.mxu0 0.0
    %572 = vmatpush1.msra.mxu0 0.0
    %573 = vmatprep.subr.mxu0 0.0
    %574 = vmatpush1.msra.mxu0 0.0
    %575 = vmatprep.subr.mxu0 0.0
    %576 = vmatpush1.msra.mxu0 0.0
    %577 = vmatprep.subr.mxu0 0.0
    %578 = vmatpush1.msra.mxu0 %v384
    %579 = vmatprep.subr.mxu0 0.0
    %580 = vmatpush1.msra.mxu0 %v383
    %581 = vmatprep.subr.mxu0 0.0
    %582 = vmatpush1.msra.mxu0 %v382
    %583 = vmatprep.subr.mxu0 0.0
    %584 = vmatpush1.msra.mxu0 %v381
    %585 = vmatprep.subr.mxu0 0.0
    %586 = vmatpush2.msra.mxu0 0.0
    %587 = vmatprep.subr.mxu0 0.0
    %588 = vmatpush2.msra.mxu0 0.0
    %589 = vmatprep.subr.mxu0 0.0
    %590 = vmatpush2.msra.mxu0 0.0
    %591 = vmatprep.subr.mxu0 0.0
    %592 = vmatpush2.msra.mxu0 0.0
    %593 = vmatprep.subr.mxu0 0.0
    %594 = vmatpush2.msra.mxu0 0.0
    %595 = vmatprep.subr.mxu0 0.0
    %596 = vmatpush2.msra.mxu0 0.0
    %597 = vmatprep.subr.mxu0 0.0
    %598 = vmatpush2.msra.mxu0 0.0
    %599 = vmatprep.subr.mxu0 0.0
    %600 = vmatpush2.msra.mxu0 0.0
    %601 = vmatprep.subr.mxu0 0.0
    %602 = vmatpush2.msra.mxu0 0.0
    %603 = vmatprep.subr.mxu0 0.0
    %604 = vmatpush2.msra.mxu0 0.0
    %605 = vmatprep.subr.mxu0 0.0
    %606 = vmatpush2.msra.mxu0 0.0
    %607 = vmatprep.subr.mxu0 0.0
    %608 = vmatpush2.msra.mxu0 0.0
    %609 = vmatprep.subr.mxu0 0.0
    %610 = vmatpush2.msra.mxu0 0.0
    %611 = vmatprep.subr.mxu0 0.0
    %612 = vmatpush2.msra.mxu0 0.0
    %613 = vmatprep.subr.mxu0 0.0
    %614 = vmatpush2.msra.mxu0 0.0
    %615 = vmatprep.subr.mxu0 0.0
    %616 = vmatpush2.msra.mxu0 0.0
    %617 = vmatprep.mubr.f32.mxu0 0.0
    %618 = vmatmul.mubr.f32.gmra.mxu0 %v397
    %v619 = vpop.f32.mrf.mxu0
    %v620 = vadd.f32 %v390, %v619
    %v621 = vpop.f32.mrf.mxu0
    %622 = vdwg.mxu0
    %v623 = vmul.f32 %v545, %v620
    %v624 = vadd.f32 %v395, %v623
    %v625 = vtanh.pop %v624
    %v626 = vsub.f32 %v392, %v625
    %v627 = vmul.f32 %v552, %v626
    %v628 = vadd.f32 %v625, %v627
    %vm629 = vcmask 257024
    %630 = vst.msk [vmem:[#allocation10] sm:$0xf] %vm629, %v628
    %s631 = scalar_lea.vmem [#allocation2], 4
    %v632 = vld [vmem:[%s631] sm:$0xf]
    %s633 = scalar_lea.vmem [#allocation3], 4
    %v634 = vld [vmem:[%s633] sm:$0xf]
    %s635 = scalar_lea.vmem [#allocation4], 4
    %v636 = vld [vmem:[%s635] sm:$0xf]
    %v638 = vsel %vm166, %v628, 0
    %640 = vmatprep.subr.mxu0 0.0
    %641 = vmatpush1.msra.mxu0 0.0
    %642 = vmatprep.subr.mxu0 0.0
    %643 = vmatpush1.msra.mxu0 0.0
    %644 = vmatprep.subr.mxu0 0.0
    %645 = vmatpush1.msra.mxu0 0.0
    %646 = vmatprep.subr.mxu0 0.0
    %647 = vmatpush1.msra.mxu0 0.0
    %648 = vmatprep.subr.mxu0 0.0
    %649 = vmatpush1.msra.mxu0 0.0
    %650 = vmatprep.subr.mxu0 0.0
    %651 = vmatpush1.msra.mxu0 0.0
    %652 = vmatprep.subr.mxu0 0.0
    %653 = vmatpush1.msra.mxu0 0.0
    %654 = vmatprep.subr.mxu0 0.0
    %655 = vmatpush1.msra.mxu0 0.0
    %656 = vmatprep.subr.mxu0 0.0
    %657 = vmatpush1.msra.mxu0 0.0
    %658 = vmatprep.subr.mxu0 0.0
    %659 = vmatpush1.msra.mxu0 0.0
    %660 = vmatprep.subr.mxu0 0.0
    %661 = vmatpush1.msra.mxu0 0.0
    %662 = vmatprep.subr.mxu0 0.0
    %663 = vmatpush1.msra.mxu0 0.0
    %664 = vmatprep.subr.mxu0 0.0
    %665 = vmatpush1.msra.mxu0 %v374
    %666 = vmatprep.subr.mxu0 0.0
    %667 = vmatpush1.msra.mxu0 %v373
    %668 = vmatprep.subr.mxu0 0.0
    %669 = vmatpush1.msra.mxu0 %v372
    %670 = vmatprep.subr.mxu0 0.0
    %671 = vmatpush1.msra.mxu0 %v371
    %672 = vmatprep.subr.mxu0 0.0
    %673 = vmatpush2.msra.mxu0 0.0
    %674 = vmatprep.subr.mxu0 0.0
    %675 = vmatpush2.msra.mxu0 0.0
    %676 = vmatprep.subr.mxu0 0.0
    %677 = vmatpush2.msra.mxu0 0.0
    %678 = vmatprep.subr.mxu0 0.0
    %679 = vmatpush2.msra.mxu0 0.0
    %680 = vmatprep.subr.mxu0 0.0
    %681 = vmatpush2.msra.mxu0 0.0
    %682 = vmatprep.subr.mxu0 0.0
    %683 = vmatpush2.msra.mxu0 0.0
    %684 = vmatprep.subr.mxu0 0.0
    %685 = vmatpush2.msra.mxu0 0.0
    %686 = vmatprep.subr.mxu0 0.0
    %687 = vmatpush2.msra.mxu0 0.0
    %688 = vmatprep.subr.mxu0 0.0
    %689 = vmatpush2.msra.mxu0 0.0
    %690 = vmatprep.subr.mxu0 0.0
    %691 = vmatpush2.msra.mxu0 0.0
    %692 = vmatprep.subr.mxu0 0.0
    %693 = vmatpush2.msra.mxu0 0.0
    %694 = vmatprep.subr.mxu0 0.0
    %695 = vmatpush2.msra.mxu0 0.0
    %696 = vmatprep.subr.mxu0 0.0
    %697 = vmatpush2.msra.mxu0 0.0
    %698 = vmatprep.subr.mxu0 0.0
    %699 = vmatpush2.msra.mxu0 0.0
    %700 = vmatprep.subr.mxu0 0.0
    %701 = vmatpush2.msra.mxu0 0.0
    %702 = vmatprep.subr.mxu0 0.0
    %703 = vmatpush2.msra.mxu0 0.0
    %704 = vmatprep.mubr.f32.mxu0 0.0
    %705 = vmatmul.mubr.f32.gmra.mxu0 %v638
    %v706 = vpop.f32.mrf.mxu0
    %v707 = vadd.f32 0.0, %v706
    %v708 = vpop.f32.mrf.mxu0
    %709 = vdwg.mxu0
    %710 = vmatprep.subr.mxu0 0.0
    %711 = vmatpush1.msra.mxu0 0.0
    %712 = vmatprep.subr.mxu0 0.0
    %713 = vmatpush1.msra.mxu0 0.0
    %714 = vmatprep.subr.mxu0 0.0
    %715 = vmatpush1.msra.mxu0 0.0
    %716 = vmatprep.subr.mxu0 0.0
    %717 = vmatpush1.msra.mxu0 0.0
    %718 = vmatprep.subr.mxu0 0.0
    %719 = vmatpush1.msra.mxu0 0.0
    %720 = vmatprep.subr.mxu0 0.0
    %721 = vmatpush1.msra.mxu0 0.0
    %722 = vmatprep.subr.mxu0 0.0
    %723 = vmatpush1.msra.mxu0 0.0
    %724 = vmatprep.subr.mxu0 0.0
    %725 = vmatpush1.msra.mxu0 0.0
    %726 = vmatprep.subr.mxu0 0.0
    %727 = vmatpush1.msra.mxu0 0.0
    %728 = vmatprep.subr.mxu0 0.0
    %729 = vmatpush1.msra.mxu0 0.0
    %730 = vmatprep.subr.mxu0 0.0
    %731 = vmatpush1.msra.mxu0 0.0
    %732 = vmatprep.subr.mxu0 0.0
    %733 = vmatpush1.msra.mxu0 0.0
    %734 = vmatprep.subr.mxu0 0.0
    %735 = vmatpush1.msra.mxu0 %v379
    %736 = vmatprep.subr.mxu0 0.0
    %737 = vmatpush1.msra.mxu0 %v378
    %738 = vmatprep.subr.mxu0 0.0
    %739 = vmatpush1.msra.mxu0 %v377
    %740 = vmatprep.subr.mxu0 0.0
    %741 = vmatpush1.msra.mxu0 %v376
    %742 = vmatprep.subr.mxu0 0.0
    %743 = vmatpush2.msra.mxu0 0.0
    %744 = vmatprep.subr.mxu0 0.0
    %745 = vmatpush2.msra.mxu0 0.0
    %746 = vmatprep.subr.mxu0 0.0
    %747 = vmatpush2.msra.mxu0 0.0
    %748 = vmatprep.subr.mxu0 0.0
    %749 = vmatpush2.msra.mxu0 0.0
    %750 = vmatprep.subr.mxu0 0.0
    %751 = vmatpush2.msra.mxu0 0.0
    %752 = vmatprep.subr.mxu0 0.0
    %753 = vmatpush2.msra.mxu0 0.0
    %754 = vmatprep.subr.mxu0 0.0
    %755 = vmatpush2.msra.mxu0 0.0
    %756 = vmatprep.subr.mxu0 0.0
    %757 = vmatpush2.msra.mxu0 0.0
    %758 = vmatprep.subr.mxu0 0.0
    %759 = vmatpush2.msra.mxu0 0.0
    %760 = vmatprep.subr.mxu0 0.0
    %761 = vmatpush2.msra.mxu0 0.0
    %762 = vmatprep.subr.mxu0 0.0
    %763 = vmatpush2.msra.mxu0 0.0
    %764 = vmatprep.subr.mxu0 0.0
    %765 = vmatpush2.msra.mxu0 0.0
    %766 = vmatprep.subr.mxu0 0.0
    %767 = vmatpush2.msra.mxu0 0.0
    %768 = vmatprep.subr.mxu0 0.0
    %769 = vmatpush2.msra.mxu0 0.0
    %770 = vmatprep.subr.mxu0 0.0
    %771 = vmatpush2.msra.mxu0 0.0
    %772 = vmatprep.subr.mxu0 0.0
    %773 = vmatpush2.msra.mxu0 0.0
    %774 = vmatprep.mubr.f32.mxu0 0.0
    %775 = vmatmul.mubr.f32.gmra.mxu0 %v638
    %v776 = vpop.f32.mrf.mxu0
    %v777 = vadd.f32 0.0, %v776
    %v778 = vpop.f32.mrf.mxu0
    %779 = vdwg.mxu0
    %v780 = vadd.f32 %v632, %v707
    %v781 = vxor.u32 %v780, 2147483648
    %v782 = vmul.f32 %v781, 1.442695
    %v783 = vpow.pop %v782
    %v784 = vadd.f32 %v783, 1.0
    %v785 = vrcp.pop %v784
    %v786 = vmul.f32 1.0, %v785
    %v787 = vadd.f32 %v634, %v777
    %v788 = vxor.u32 %v787, 2147483648
    %v789 = vmul.f32 %v788, 1.442695
    %v790 = vpow.pop %v789
    %v791 = vadd.f32 %v790, 1.0
    %v792 = vrcp.pop %v791
    %v793 = vmul.f32 1.0, %v792
    %794 = vmatprep.subr.mxu0 0.0
    %795 = vmatpush1.msra.mxu0 0.0
    %796 = vmatprep.subr.mxu0 0.0
    %797 = vmatpush1.msra.mxu0 0.0
    %798 = vmatprep.subr.mxu0 0.0
    %799 = vmatpush1.msra.mxu0 0.0
    %800 = vmatprep.subr.mxu0 0.0
    %801 = vmatpush1.msra.mxu0 0.0
    %802 = vmatprep.subr.mxu0 0.0
    %803 = vmatpush1.msra.mxu0 0.0
    %804 = vmatprep.subr.mxu0 0.0
    %805 = vmatpush1.msra.mxu0 0.0
    %806 = vmatprep.subr.mxu0 0.0
    %807 = vmatpush1.msra.mxu0 0.0
    %808 = vmatprep.subr.mxu0 0.0
    %809 = vmatpush1.msra.mxu0 0.0
    %810 = vmatprep.subr.mxu0 0.0
    %811 = vmatpush1.msra.mxu0 0.0
    %812 = vmatprep.subr.mxu0 0.0
    %813 = vmatpush1.msra.mxu0 0.0
    %814 = vmatprep.subr.mxu0 0.0
    %815 = vmatpush1.msra.mxu0 0.0
    %816 = vmatprep.subr.mxu0 0.0
    %817 = vmatpush1.msra.mxu0 0.0
    %818 = vmatprep.subr.mxu0 0.0
    %819 = vmatpush1.msra.mxu0 %v384
    %820 = vmatprep.subr.mxu0 0.0
    %821 = vmatpush1.msra.mxu0 %v383
    %822 = vmatprep.subr.mxu0 0.0
    %823 = vmatpush1.msra.mxu0 %v382
    %824 = vmatprep.subr.mxu0 0.0
    %825 = vmatpush1.msra.mxu0 %v381
    %826 = vmatprep.subr.mxu0 0.0
    %827 = vmatpush2.msra.mxu0 0.0
    %828 = vmatprep.subr.mxu0 0.0
    %829 = vmatpush2.msra.mxu0 0.0
    %830 = vmatprep.subr.mxu0 0.0
    %831 = vmatpush2.msra.mxu0 0.0
    %832 = vmatprep.subr.mxu0 0.0
    %833 = vmatpush2.msra.mxu0 0.0
    %834 = vmatprep.subr.mxu0 0.0
    %835 = vmatpush2.msra.mxu0 0.0
    %836 = vmatprep.subr.mxu0 0.0
    %837 = vmatpush2.msra.mxu0 0.0
    %838 = vmatprep.subr.mxu0 0.0
    %839 = vmatpush2.msra.mxu0 0.0
    %840 = vmatprep.subr.mxu0 0.0
    %841 = vmatpush2.msra.mxu0 0.0
    %842 = vmatprep.subr.mxu0 0.0
    %843 = vmatpush2.msra.mxu0 0.0
    %844 = vmatprep.subr.mxu0 0.0
    %845 = vmatpush2.msra.mxu0 0.0
    %846 = vmatprep.subr.mxu0 0.0
    %847 = vmatpush2.msra.mxu0 0.0
    %848 = vmatprep.subr.mxu0 0.0
    %849 = vmatpush2.msra.mxu0 0.0
    %850 = vmatprep.subr.mxu0 0.0
    %851 = vmatpush2.msra.mxu0 0.0
    %852 = vmatprep.subr.mxu0 0.0
    %853 = vmatpush2.msra.mxu0 0.0
    %854 = vmatprep.subr.mxu0 0.0
    %855 = vmatpush2.msra.mxu0 0.0
    %856 = vmatprep.subr.mxu0 0.0
    %857 = vmatpush2.msra.mxu0 0.0
    %858 = vmatprep.mubr.f32.mxu0 0.0
    %859 = vmatmul.mubr.f32.gmra.mxu0 %v638
    %v860 = vpop.f32.mrf.mxu0
    %v861 = vadd.f32 %v390, %v860
    %v862 = vpop.f32.mrf.mxu0
    %863 = vdwg.mxu0
    %v864 = vmul.f32 %v786, %v861
    %v865 = vadd.f32 %v636, %v864
    %v866 = vtanh.pop %v865
    %v867 = vsub.f32 %v628, %v866
    %v868 = vmul.f32 %v793, %v867
    %v869 = vadd.f32 %v866, %v868
    %s870 = scalar_lea.vmem [#allocation10], 4
    %871 = vst.msk [vmem:[%s870] sm:$0xf] %vm629, %v869
    %s872 = scalar_lea.vmem [#allocation2], 8
    %v873 = vld [vmem:[%s872] sm:$0xf]
    %s874 = scalar_lea.vmem [#allocation3], 8
    %v875 = vld [vmem:[%s874] sm:$0xf]
    %s876 = scalar_lea.vmem [#allocation4], 8
    %v877 = vld [vmem:[%s876] sm:$0xf]
    %v879 = vsel %vm166, %v869, 0
    %881 = vmatprep.subr.mxu0 0.0
    %882 = vmatpush1.msra.mxu0 0.0
    %883 = vmatprep.subr.mxu0 0.0
    %884 = vmatpush1.msra.mxu0 0.0
    %885 = vmatprep.subr.mxu0 0.0
    %886 = vmatpush1.msra.mxu0 0.0
    %887 = vmatprep.subr.mxu0 0.0
    %888 = vmatpush1.msra.mxu0 0.0
    %889 = vmatprep.subr.mxu0 0.0
    %890 = vmatpush1.msra.mxu0 0.0
    %891 = vmatprep.subr.mxu0 0.0
    %892 = vmatpush1.msra.mxu0 0.0
    %893 = vmatprep.subr.mxu0 0.0
    %894 = vmatpush1.msra.mxu0 0.0
    %895 = vmatprep.subr.mxu0 0.0
    %896 = vmatpush1.msra.mxu0 0.0
    %897 = vmatprep.subr.mxu0 0.0
    %898 = vmatpush1.msra.mxu0 0.0
    %899 = vmatprep.subr.mxu0 0.0
    %900 = vmatpush1.msra.mxu0 0.0
    %901 = vmatprep.subr.mxu0 0.0
    %902 = vmatpush1.msra.mxu0 0.0
    %903 = vmatprep.subr.mxu0 0.0
    %904 = vmatpush1.msra.mxu0 0.0
    %905 = vmatprep.subr.mxu0 0.0
    %906 = vmatpush1.msra.mxu0 %v374
    %907 = vmatprep.subr.mxu0 0.0
    %908 = vmatpush1.msra.mxu0 %v373
    %909 = vmatprep.subr.mxu0 0.0
    %910 = vmatpush1.msra.mxu0 %v372
    %911 = vmatprep.subr.mxu0 0.0
    %912 = vmatpush1.msra.mxu0 %v371
    %913 = vmatprep.subr.mxu0 0.0
    %914 = vmatpush2.msra.mxu0 0.0
    %915 = vmatprep.subr.mxu0 0.0
    %916 = vmatpush2.msra.mxu0 0.0
    %917 = vmatprep.subr.mxu0 0.0
    %918 = vmatpush2.msra.mxu0 0.0
    %919 = vmatprep.subr.mxu0 0.0
    %920 = vmatpush2.msra.mxu0 0.0
    %921 = vmatprep.subr.mxu0 0.0
    %922 = vmatpush2.msra.mxu0 0.0
    %923 = vmatprep.subr.mxu0 0.0
    %924 = vmatpush2.msra.mxu0 0.0
    %925 = vmatprep.subr.mxu0 0.0
    %926 = vmatpush2.msra.mxu0 0.0
    %927 = vmatprep.subr.mxu0 0.0
    %928 = vmatpush2.msra.mxu0 0.0
    %929 = vmatprep.subr.mxu0 0.0
    %930 = vmatpush2.msra.mxu0 0.0
    %931 = vmatprep.subr.mxu0 0.0
    %932 = vmatpush2.msra.mxu0 0.0
    %933 = vmatprep.subr.mxu0 0.0
    %934 = vmatpush2.msra.mxu0 0.0
    %935 = vmatprep.subr.mxu0 0.0
    %936 = vmatpush2.msra.mxu0 0.0
    %937 = vmatprep.subr.mxu0 0.0
    %938 = vmatpush2.msra.mxu0 0.0
    %939 = vmatprep.subr.mxu0 0.0
    %940 = vmatpush2.msra.mxu0 0.0
    %941 = vmatprep.subr.mxu0 0.0
    %942 = vmatpush2.msra.mxu0 0.0
    %943 = vmatprep.subr.mxu0 0.0
    %944 = vmatpush2.msra.mxu0 0.0
    %945 = vmatprep.mubr.f32.mxu0 0.0
    %946 = vmatmul.mubr.f32.gmra.mxu0 %v879
    %v947 = vpop.f32.mrf.mxu0
    %v948 = vadd.f32 0.0, %v947
    %v949 = vpop.f32.mrf.mxu0
    %950 = vdwg.mxu0
    %951 = vmatprep.subr.mxu0 0.0
    %952 = vmatpush1.msra.mxu0 0.0
    %953 = vmatprep.subr.mxu0 0.0
    %954 = vmatpush1.msra.mxu0 0.0
    %955 = vmatprep.subr.mxu0 0.0
    %956 = vmatpush1.msra.mxu0 0.0
    %957 = vmatprep.subr.mxu0 0.0
    %958 = vmatpush1.msra.mxu0 0.0
    %959 = vmatprep.subr.mxu0 0.0
    %960 = vmatpush1.msra.mxu0 0.0
    %961 = vmatprep.subr.mxu0 0.0
    %962 = vmatpush1.msra.mxu0 0.0
    %963 = vmatprep.subr.mxu0 0.0
    %964 = vmatpush1.msra.mxu0 0.0
    %965 = vmatprep.subr.mxu0 0.0
    %966 = vmatpush1.msra.mxu0 0.0
    %967 = vmatprep.subr.mxu0 0.0
    %968 = vmatpush1.msra.mxu0 0.0
    %969 = vmatprep.subr.mxu0 0.0
    %970 = vmatpush1.msra.mxu0 0.0
    %971 = vmatprep.subr.mxu0 0.0
    %972 = vmatpush1.msra.mxu0 0.0
    %973 = vmatprep.subr.mxu0 0.0
    %974 = vmatpush1.msra.mxu0 0.0
    %975 = vmatprep.subr.mxu0 0.0
    %976 = vmatpush1.msra.mxu0 %v379
    %977 = vmatprep.subr.mxu0 0.0
    %978 = vmatpush1.msra.mxu0 %v378
    %979 = vmatprep.subr.mxu0 0.0
    %980 = vmatpush1.msra.mxu0 %v377
    %981 = vmatprep.subr.mxu0 0.0
    %982 = vmatpush1.msra.mxu0 %v376
    %983 = vmatprep.subr.mxu0 0.0
    %984 = vmatpush2.msra.mxu0 0.0
    %985 = vmatprep.subr.mxu0 0.0
    %986 = vmatpush2.msra.mxu0 0.0
    %987 = vmatprep.subr.mxu0 0.0
    %988 = vmatpush2.msra.mxu0 0.0
    %989 = vmatprep.subr.mxu0 0.0
    %990 = vmatpush2.msra.mxu0 0.0
    %991 = vmatprep.subr.mxu0 0.0
    %992 = vmatpush2.msra.mxu0 0.0
    %993 = vmatprep.subr.mxu0 0.0
    %994 = vmatpush2.msra.mxu0 0.0
    %995 = vmatprep.subr.mxu0 0.0
    %996 = vmatpush2.msra.mxu0 0.0
    %997 = vmatprep.subr.mxu0 0.0
    %998 = vmatpush2.msra.mxu0 0.0
    %999 = vmatprep.subr.mxu0 0.0
    %1000 = vmatpush2.msra.mxu0 0.0
    %1001 = vmatprep.subr.mxu0 0.0
    %1002 = vmatpush2.msra.mxu0 0.0
    %1003 = vmatprep.subr.mxu0 0.0
    %1004 = vmatpush2.msra.mxu0 0.0
    %1005 = vmatprep.subr.mxu0 0.0
    %1006 = vmatpush2.msra.mxu0 0.0
    %1007 = vmatprep.subr.mxu0 0.0
    %1008 = vmatpush2.msra.mxu0 0.0
    %1009 = vmatprep.subr.mxu0 0.0
    %1010 = vmatpush2.msra.mxu0 0.0
    %1011 = vmatprep.subr.mxu0 0.0
    %1012 = vmatpush2.msra.mxu0 0.0
    %1013 = vmatprep.subr.mxu0 0.0
    %1014 = vmatpush2.msra.mxu0 0.0
    %1015 = vmatprep.mubr.f32.mxu0 0.0
    %1016 = vmatmul.mubr.f32.gmra.mxu0 %v879
    %v1017 = vpop.f32.mrf.mxu0
    %v1018 = vadd.f32 0.0, %v1017
    %v1019 = vpop.f32.mrf.mxu0
    %1020 = vdwg.mxu0
    %v1021 = vadd.f32 %v873, %v948
    %v1022 = vxor.u32 %v1021, 2147483648
    %v1023 = vmul.f32 %v1022, 1.442695
    %v1024 = vpow.pop %v1023
    %v1025 = vadd.f32 %v1024, 1.0
    %v1026 = vrcp.pop %v1025
    %v1027 = vmul.f32 1.0, %v1026
    %v1028 = vadd.f32 %v875, %v1018
    %v1029 = vxor.u32 %v1028, 2147483648
    %v1030 = vmul.f32 %v1029, 1.442695
    %v1031 = vpow.pop %v1030
    %v1032 = vadd.f32 %v1031, 1.0
    %v1033 = vrcp.pop %v1032
    %v1034 = vmul.f32 1.0, %v1033
    %1035 = vmatprep.subr.mxu0 0.0
    %1036 = vmatpush1.msra.mxu0 0.0
    %1037 = vmatprep.subr.mxu0 0.0
    %1038 = vmatpush1.msra.mxu0 0.0
    %1039 = vmatprep.subr.mxu0 0.0
    %1040 = vmatpush1.msra.mxu0 0.0
    %1041 = vmatprep.subr.mxu0 0.0
    %1042 = vmatpush1.msra.mxu0 0.0
    %1043 = vmatprep.subr.mxu0 0.0
    %1044 = vmatpush1.msra.mxu0 0.0
    %1045 = vmatprep.subr.mxu0 0.0
    %1046 = vmatpush1.msra.mxu0 0.0
    %1047 = vmatprep.subr.mxu0 0.0
    %1048 = vmatpush1.msra.mxu0 0.0
    %1049 = vmatprep.subr.mxu0 0.0
    %1050 = vmatpush1.msra.mxu0 0.0
    %1051 = vmatprep.subr.mxu0 0.0
    %1052 = vmatpush1.msra.mxu0 0.0
    %1053 = vmatprep.subr.mxu0 0.0
    %1054 = vmatpush1.msra.mxu0 0.0
    %1055 = vmatprep.subr.mxu0 0.0
    %1056 = vmatpush1.msra.mxu0 0.0
    %1057 = vmatprep.subr.mxu0 0.0
    %1058 = vmatpush1.msra.mxu0 0.0
    %1059 = vmatprep.subr.mxu0 0.0
    %1060 = vmatpush1.msra.mxu0 %v384
    %1061 = vmatprep.subr.mxu0 0.0
    %1062 = vmatpush1.msra.mxu0 %v383
    %1063 = vmatprep.subr.mxu0 0.0
    %1064 = vmatpush1.msra.mxu0 %v382
    %1065 = vmatprep.subr.mxu0 0.0
    %1066 = vmatpush1.msra.mxu0 %v381
    %1067 = vmatprep.subr.mxu0 0.0
    %1068 = vmatpush2.msra.mxu0 0.0
    %1069 = vmatprep.subr.mxu0 0.0
    %1070 = vmatpush2.msra.mxu0 0.0
    %1071 = vmatprep.subr.mxu0 0.0
    %1072 = vmatpush2.msra.mxu0 0.0
    %1073 = vmatprep.subr.mxu0 0.0
    %1074 = vmatpush2.msra.mxu0 0.0
    %1075 = vmatprep.subr.mxu0 0.0
    %1076 = vmatpush2.msra.mxu0 0.0
    %1077 = vmatprep.subr.mxu0 0.0
    %1078 = vmatpush2.msra.mxu0 0.0
    %1079 = vmatprep.subr.mxu0 0.0
    %1080 = vmatpush2.msra.mxu0 0.0
    %1081 = vmatprep.subr.mxu0 0.0
    %1082 = vmatpush2.msra.mxu0 0.0
    %1083 = vmatprep.subr.mxu0 0.0
    %1084 = vmatpush2.msra.mxu0 0.0
    %1085 = vmatprep.subr.mxu0 0.0
    %1086 = vmatpush2.msra.mxu0 0.0
    %1087 = vmatprep.subr.mxu0 0.0
    %1088 = vmatpush2.msra.mxu0 0.0
    %1089 = vmatprep.subr.mxu0 0.0
    %1090 = vmatpush2.msra.mxu0 0.0
    %1091 = vmatprep.subr.mxu0 0.0
    %1092 = vmatpush2.msra.mxu0 0.0
    %1093 = vmatprep.subr.mxu0 0.0
    %1094 = vmatpush2.msra.mxu0 0.0
    %1095 = vmatprep.subr.mxu0 0.0
    %1096 = vmatpush2.msra.mxu0 0.0
    %1097 = vmatprep.subr.mxu0 0.0
    %1098 = vmatpush2.msra.mxu0 0.0
    %1099 = vmatprep.mubr.f32.mxu0 0.0
    %1100 = vmatmul.mubr.f32.gmra.mxu0 %v879
    %v1101 = vpop.f32.mrf.mxu0
    %v1102 = vadd.f32 %v390, %v1101
    %v1103 = vpop.f32.mrf.mxu0
    %1104 = vdwg.mxu0
    %v1105 = vmul.f32 %v1027, %v1102
    %v1106 = vadd.f32 %v877, %v1105
    %v1107 = vtanh.pop %v1106
    %v1108 = vsub.f32 %v869, %v1107
    %v1109 = vmul.f32 %v1034, %v1108
    %v1110 = vadd.f32 %v1107, %v1109
    %s1111 = scalar_lea.vmem [#allocation10], 8
    %1112 = vst.msk [vmem:[%s1111] sm:$0xf] %vm629, %v1110
    %s1113 = scalar_lea.vmem [#allocation2], 12
    %v1114 = vld [vmem:[%s1113] sm:$0xf]
    %s1115 = scalar_lea.vmem [#allocation3], 12
    %v1116 = vld [vmem:[%s1115] sm:$0xf]
    %s1117 = scalar_lea.vmem [#allocation4], 12
    %v1118 = vld [vmem:[%s1117] sm:$0xf]
    %v1120 = vsel %vm166, %v1110, 0
    %1122 = vmatprep.subr.mxu0 0.0
    %1123 = vmatpush1.msra.mxu0 0.0
    %1124 = vmatprep.subr.mxu0 0.0
    %1125 = vmatpush1.msra.mxu0 0.0
    %1126 = vmatprep.subr.mxu0 0.0
    %1127 = vmatpush1.msra.mxu0 0.0
    %1128 = vmatprep.subr.mxu0 0.0
    %1129 = vmatpush1.msra.mxu0 0.0
    %1130 = vmatprep.subr.mxu0 0.0
    %1131 = vmatpush1.msra.mxu0 0.0
    %1132 = vmatprep.subr.mxu0 0.0
    %1133 = vmatpush1.msra.mxu0 0.0
    %1134 = vmatprep.subr.mxu0 0.0
    %1135 = vmatpush1.msra.mxu0 0.0
    %1136 = vmatprep.subr.mxu0 0.0
    %1137 = vmatpush1.msra.mxu0 0.0
    %1138 = vmatprep.subr.mxu0 0.0
    %1139 = vmatpush1.msra.mxu0 0.0
    %1140 = vmatprep.subr.mxu0 0.0
    %1141 = vmatpush1.msra.mxu0 0.0
    %1142 = vmatprep.subr.mxu0 0.0
    %1143 = vmatpush1.msra.mxu0 0.0
    %1144 = vmatprep.subr.mxu0 0.0
    %1145 = vmatpush1.msra.mxu0 0.0
    %1146 = vmatprep.subr.mxu0 0.0
    %1147 = vmatpush1.msra.mxu0 %v374
    %1148 = vmatprep.subr.mxu0 0.0
    %1149 = vmatpush1.msra.mxu0 %v373
    %1150 = vmatprep.subr.mxu0 0.0
    %1151 = vmatpush1.msra.mxu0 %v372
    %1152 = vmatprep.subr.mxu0 0.0
    %1153 = vmatpush1.msra.mxu0 %v371
    %1154 = vmatprep.subr.mxu0 0.0
    %1155 = vmatpush2.msra.mxu0 0.0
    %1156 = vmatprep.subr.mxu0 0.0
    %1157 = vmatpush2.msra.mxu0 0.0
    %1158 = vmatprep.subr.mxu0 0.0
    %1159 = vmatpush2.msra.mxu0 0.0
    %1160 = vmatprep.subr.mxu0 0.0
    %1161 = vmatpush2.msra.mxu0 0.0
    %1162 = vmatprep.subr.mxu0 0.0
    %1163 = vmatpush2.msra.mxu0 0.0
    %1164 = vmatprep.subr.mxu0 0.0
    %1165 = vmatpush2.msra.mxu0 0.0
    %1166 = vmatprep.subr.mxu0 0.0
    %1167 = vmatpush2.msra.mxu0 0.0
    %1168 = vmatprep.subr.mxu0 0.0
    %1169 = vmatpush2.msra.mxu0 0.0
    %1170 = vmatprep.subr.mxu0 0.0
    %1171 = vmatpush2.msra.mxu0 0.0
    %1172 = vmatprep.subr.mxu0 0.0
    %1173 = vmatpush2.msra.mxu0 0.0
    %1174 = vmatprep.subr.mxu0 0.0
    %1175 = vmatpush2.msra.mxu0 0.0
    %1176 = vmatprep.subr.mxu0 0.0
    %1177 = vmatpush2.msra.mxu0 0.0
    %1178 = vmatprep.subr.mxu0 0.0
    %1179 = vmatpush2.msra.mxu0 0.0
    %1180 = vmatprep.subr.mxu0 0.0
    %1181 = vmatpush2.msra.mxu0 0.0
    %1182 = vmatprep.subr.mxu0 0.0
    %1183 = vmatpush2.msra.mxu0 0.0
    %1184 = vmatprep.subr.mxu0 0.0
    %1185 = vmatpush2.msra.mxu0 0.0
    %1186 = vmatprep.mubr.f32.mxu0 0.0
    %1187 = vmatmul.mubr.f32.gmra.mxu0 %v1120
    %v1188 = vpop.f32.mrf.mxu0
    %v1189 = vadd.f32 0.0, %v1188
    %v1190 = vpop.f32.mrf.mxu0
    %1191 = vdwg.mxu0
    %1192 = vmatprep.subr.mxu0 0.0
    %1193 = vmatpush1.msra.mxu0 0.0
    %1194 = vmatprep.subr.mxu0 0.0
    %1195 = vmatpush1.msra.mxu0 0.0
    %1196 = vmatprep.subr.mxu0 0.0
    %1197 = vmatpush1.msra.mxu0 0.0
    %1198 = vmatprep.subr.mxu0 0.0
    %1199 = vmatpush1.msra.mxu0 0.0
    %1200 = vmatprep.subr.mxu0 0.0
    %1201 = vmatpush1.msra.mxu0 0.0
    %1202 = vmatprep.subr.mxu0 0.0
    %1203 = vmatpush1.msra.mxu0 0.0
    %1204 = vmatprep.subr.mxu0 0.0
    %1205 = vmatpush1.msra.mxu0 0.0
    %1206 = vmatprep.subr.mxu0 0.0
    %1207 = vmatpush1.msra.mxu0 0.0
    %1208 = vmatprep.subr.mxu0 0.0
    %1209 = vmatpush1.msra.mxu0 0.0
    %1210 = vmatprep.subr.mxu0 0.0
    %1211 = vmatpush1.msra.mxu0 0.0
    %1212 = vmatprep.subr.mxu0 0.0
    %1213 = vmatpush1.msra.mxu0 0.0
    %1214 = vmatprep.subr.mxu0 0.0
    %1215 = vmatpush1.msra.mxu0 0.0
    %1216 = vmatprep.subr.mxu0 0.0
    %1217 = vmatpush1.msra.mxu0 %v379
    %1218 = vmatprep.subr.mxu0 0.0
    %1219 = vmatpush1.msra.mxu0 %v378
    %1220 = vmatprep.subr.mxu0 0.0
    %1221 = vmatpush1.msra.mxu0 %v377
    %1222 = vmatprep.subr.mxu0 0.0
    %1223 = vmatpush1.msra.mxu0 %v376
    %1224 = vmatprep.subr.mxu0 0.0
    %1225 = vmatpush2.msra.mxu0 0.0
    %1226 = vmatprep.subr.mxu0 0.0
    %1227 = vmatpush2.msra.mxu0 0.0
    %1228 = vmatprep.subr.mxu0 0.0
    %1229 = vmatpush2.msra.mxu0 0.0
    %1230 = vmatprep.subr.mxu0 0.0
    %1231 = vmatpush2.msra.mxu0 0.0
    %1232 = vmatprep.subr.mxu0 0.0
    %1233 = vmatpush2.msra.mxu0 0.0
    %1234 = vmatprep.subr.mxu0 0.0
    %1235 = vmatpush2.msra.mxu0 0.0
    %1236 = vmatprep.subr.mxu0 0.0
    %1237 = vmatpush2.msra.mxu0 0.0
    %1238 = vmatprep.subr.mxu0 0.0
    %1239 = vmatpush2.msra.mxu0 0.0
    %1240 = vmatprep.subr.mxu0 0.0
    %1241 = vmatpush2.msra.mxu0 0.0
    %1242 = vmatprep.subr.mxu0 0.0
    %1243 = vmatpush2.msra.mxu0 0.0
    %1244 = vmatprep.subr.mxu0 0.0
    %1245 = vmatpush2.msra.mxu0 0.0
    %1246 = vmatprep.subr.mxu0 0.0
    %1247 = vmatpush2.msra.mxu0 0.0
    %1248 = vmatprep.subr.mxu0 0.0
    %1249 = vmatpush2.msra.mxu0 0.0
    %1250 = vmatprep.subr.mxu0 0.0
    %1251 = vmatpush2.msra.mxu0 0.0
    %1252 = vmatprep.subr.mxu0 0.0
    %1253 = vmatpush2.msra.mxu0 0.0
    %1254 = vmatprep.subr.mxu0 0.0
    %1255 = vmatpush2.msra.mxu0 0.0
    %1256 = vmatprep.mubr.f32.mxu0 0.0
    %1257 = vmatmul.mubr.f32.gmra.mxu0 %v1120
    %v1258 = vpop.f32.mrf.mxu0
    %v1259 = vadd.f32 0.0, %v1258
    %v1260 = vpop.f32.mrf.mxu0
    %1261 = vdwg.mxu0
    %v1262 = vadd.f32 %v1114, %v1189
    %v1263 = vxor.u32 %v1262, 2147483648
    %v1264 = vmul.f32 %v1263, 1.442695
    %v1265 = vpow.pop %v1264
    %v1266 = vadd.f32 %v1265, 1.0
    %v1267 = vrcp.pop %v1266
    %v1268 = vmul.f32 1.0, %v1267
    %v1269 = vadd.f32 %v1116, %v1259
    %v1270 = vxor.u32 %v1269, 2147483648
    %v1271 = vmul.f32 %v1270, 1.442695
    %v1272 = vpow.pop %v1271
    %v1273 = vadd.f32 %v1272, 1.0
    %v1274 = vrcp.pop %v1273
    %v1275 = vmul.f32 1.0, %v1274
    %1276 = vmatprep.subr.mxu0 0.0
    %1277 = vmatpush1.msra.mxu0 0.0
    %1278 = vmatprep.subr.mxu0 0.0
    %1279 = vmatpush1.msra.mxu0 0.0
    %1280 = vmatprep.subr.mxu0 0.0
    %1281 = vmatpush1.msra.mxu0 0.0
    %1282 = vmatprep.subr.mxu0 0.0
    %1283 = vmatpush1.msra.mxu0 0.0
    %1284 = vmatprep.subr.mxu0 0.0
    %1285 = vmatpush1.msra.mxu0 0.0
    %1286 = vmatprep.subr.mxu0 0.0
    %1287 = vmatpush1.msra.mxu0 0.0
    %1288 = vmatprep.subr.mxu0 0.0
    %1289 = vmatpush1.msra.mxu0 0.0
    %1290 = vmatprep.subr.mxu0 0.0
    %1291 = vmatpush1.msra.mxu0 0.0
    %1292 = vmatprep.subr.mxu0 0.0
    %1293 = vmatpush1.msra.mxu0 0.0
    %1294 = vmatprep.subr.mxu0 0.0
    %1295 = vmatpush1.msra.mxu0 0.0
    %1296 = vmatprep.subr.mxu0 0.0
    %1297 = vmatpush1.msra.mxu0 0.0
    %1298 = vmatprep.subr.mxu0 0.0
    %1299 = vmatpush1.msra.mxu0 0.0
    %1300 = vmatprep.subr.mxu0 0.0
    %1301 = vmatpush1.msra.mxu0 %v384
    %1302 = vmatprep.subr.mxu0 0.0
    %1303 = vmatpush1.msra.mxu0 %v383
    %1304 = vmatprep.subr.mxu0 0.0
    %1305 = vmatpush1.msra.mxu0 %v382
    %1306 = vmatprep.subr.mxu0 0.0
    %1307 = vmatpush1.msra.mxu0 %v381
    %1308 = vmatprep.subr.mxu0 0.0
    %1309 = vmatpush2.msra.mxu0 0.0
    %1310 = vmatprep.subr.mxu0 0.0
    %1311 = vmatpush2.msra.mxu0 0.0
    %1312 = vmatprep.subr.mxu0 0.0
    %1313 = vmatpush2.msra.mxu0 0.0
    %1314 = vmatprep.subr.mxu0 0.0
    %1315 = vmatpush2.msra.mxu0 0.0
    %1316 = vmatprep.subr.mxu0 0.0
    %1317 = vmatpush2.msra.mxu0 0.0
    %1318 = vmatprep.subr.mxu0 0.0
    %1319 = vmatpush2.msra.mxu0 0.0
    %1320 = vmatprep.subr.mxu0 0.0
    %1321 = vmatpush2.msra.mxu0 0.0
    %1322 = vmatprep.subr.mxu0 0.0
    %1323 = vmatpush2.msra.mxu0 0.0
    %1324 = vmatprep.subr.mxu0 0.0
    %1325 = vmatpush2.msra.mxu0 0.0
    %1326 = vmatprep.subr.mxu0 0.0
    %1327 = vmatpush2.msra.mxu0 0.0
    %1328 = vmatprep.subr.mxu0 0.0
    %1329 = vmatpush2.msra.mxu0 0.0
    %1330 = vmatprep.subr.mxu0 0.0
    %1331 = vmatpush2.msra.mxu0 0.0
    %1332 = vmatprep.subr.mxu0 0.0
    %1333 = vmatpush2.msra.mxu0 0.0
    %1334 = vmatprep.subr.mxu0 0.0
    %1335 = vmatpush2.msra.mxu0 0.0
    %1336 = vmatprep.subr.mxu0 0.0
    %1337 = vmatpush2.msra.mxu0 0.0
    %1338 = vmatprep.subr.mxu0 0.0
    %1339 = vmatpush2.msra.mxu0 0.0
    %1340 = vmatprep.mubr.f32.mxu0 0.0
    %1341 = vmatmul.mubr.f32.gmra.mxu0 %v1120
    %v1342 = vpop.f32.mrf.mxu0
    %v1343 = vadd.f32 %v390, %v1342
    %v1344 = vpop.f32.mrf.mxu0
    %1345 = vdwg.mxu0
    %v1346 = vmul.f32 %v1268, %v1343
    %v1347 = vadd.f32 %v1118, %v1346
    %v1348 = vtanh.pop %v1347
    %v1349 = vsub.f32 %v1110, %v1348
    %v1350 = vmul.f32 %v1275, %v1349
    %v1351 = vadd.f32 %v1348, %v1350
    %s1352 = scalar_lea.vmem [#allocation10], 12
    %1353 = vst.msk [vmem:[%s1352] sm:$0xf] %vm629, %v1351
    %s1354 = scalar_lea.vmem [#allocation2], 16
    %v1355 = vld [vmem:[%s1354] sm:$0xf]
    %s1356 = scalar_lea.vmem [#allocation3], 16
    %v1357 = vld [vmem:[%s1356] sm:$0xf]
    %s1358 = scalar_lea.vmem [#allocation4], 16
    %v1359 = vld [vmem:[%s1358] sm:$0xf]
    %v1361 = vsel %vm166, %v1351, 0
    %1363 = vmatprep.subr.mxu0 0.0
    %1364 = vmatpush1.msra.mxu0 0.0
    %1365 = vmatprep.subr.mxu0 0.0
    %1366 = vmatpush1.msra.mxu0 0.0
    %1367 = vmatprep.subr.mxu0 0.0
    %1368 = vmatpush1.msra.mxu0 0.0
    %1369 = vmatprep.subr.mxu0 0.0
    %1370 = vmatpush1.msra.mxu0 0.0
    %1371 = vmatprep.subr.mxu0 0.0
    %1372 = vmatpush1.msra.mxu0 0.0
    %1373 = vmatprep.subr.mxu0 0.0
    %1374 = vmatpush1.msra.mxu0 0.0
    %1375 = vmatprep.subr.mxu0 0.0
    %1376 = vmatpush1.msra.mxu0 0.0
    %1377 = vmatprep.subr.mxu0 0.0
    %1378 = vmatpush1.msra.mxu0 0.0
    %1379 = vmatprep.subr.mxu0 0.0
    %1380 = vmatpush1.msra.mxu0 0.0
    %1381 = vmatprep.subr.mxu0 0.0
    %1382 = vmatpush1.msra.mxu0 0.0
    %1383 = vmatprep.subr.mxu0 0.0
    %1384 = vmatpush1.msra.mxu0 0.0
    %1385 = vmatprep.subr.mxu0 0.0
    %1386 = vmatpush1.msra.mxu0 0.0
    %1387 = vmatprep.subr.mxu0 0.0
    %1388 = vmatpush1.msra.mxu0 %v374
    %1389 = vmatprep.subr.mxu0 0.0
    %1390 = vmatpush1.msra.mxu0 %v373
    %1391 = vmatprep.subr.mxu0 0.0
    %1392 = vmatpush1.msra.mxu0 %v372
    %1393 = vmatprep.subr.mxu0 0.0
    %1394 = vmatpush1.msra.mxu0 %v371
    %1395 = vmatprep.subr.mxu0 0.0
    %1396 = vmatpush2.msra.mxu0 0.0
    %1397 = vmatprep.subr.mxu0 0.0
    %1398 = vmatpush2.msra.mxu0 0.0
    %1399 = vmatprep.subr.mxu0 0.0
    %1400 = vmatpush2.msra.mxu0 0.0
    %1401 = vmatprep.subr.mxu0 0.0
    %1402 = vmatpush2.msra.mxu0 0.0
    %1403 = vmatprep.subr.mxu0 0.0
    %1404 = vmatpush2.msra.mxu0 0.0
    %1405 = vmatprep.subr.mxu0 0.0
    %1406 = vmatpush2.msra.mxu0 0.0
    %1407 = vmatprep.subr.mxu0 0.0
    %1408 = vmatpush2.msra.mxu0 0.0
    %1409 = vmatprep.subr.mxu0 0.0
    %1410 = vmatpush2.msra.mxu0 0.0
    %1411 = vmatprep.subr.mxu0 0.0
    %1412 = vmatpush2.msra.mxu0 0.0
    %1413 = vmatprep.subr.mxu0 0.0
    %1414 = vmatpush2.msra.mxu0 0.0
    %1415 = vmatprep.subr.mxu0 0.0
    %1416 = vmatpush2.msra.mxu0 0.0
    %1417 = vmatprep.subr.mxu0 0.0
    %1418 = vmatpush2.msra.mxu0 0.0
    %1419 = vmatprep.subr.mxu0 0.0
    %1420 = vmatpush2.msra.mxu0 0.0
    %1421 = vmatprep.subr.mxu0 0.0
    %1422 = vmatpush2.msra.mxu0 0.0
    %1423 = vmatprep.subr.mxu0 0.0
    %1424 = vmatpush2.msra.mxu0 0.0
    %1425 = vmatprep.subr.mxu0 0.0
    %1426 = vmatpush2.msra.mxu0 0.0
    %1427 = vmatprep.mubr.f32.mxu0 0.0
    %1428 = vmatmul.mubr.f32.gmra.mxu0 %v1361
    %v1429 = vpop.f32.mrf.mxu0
    %v1430 = vadd.f32 0.0, %v1429
    %v1431 = vpop.f32.mrf.mxu0
    %1432 = vdwg.mxu0
    %1433 = vmatprep.subr.mxu0 0.0
    %1434 = vmatpush1.msra.mxu0 0.0
    %1435 = vmatprep.subr.mxu0 0.0
    %1436 = vmatpush1.msra.mxu0 0.0
    %1437 = vmatprep.subr.mxu0 0.0
    %1438 = vmatpush1.msra.mxu0 0.0
    %1439 = vmatprep.subr.mxu0 0.0
    %1440 = vmatpush1.msra.mxu0 0.0
    %1441 = vmatprep.subr.mxu0 0.0
    %1442 = vmatpush1.msra.mxu0 0.0
    %1443 = vmatprep.subr.mxu0 0.0
    %1444 = vmatpush1.msra.mxu0 0.0
    %1445 = vmatprep.subr.mxu0 0.0
    %1446 = vmatpush1.msra.mxu0 0.0
    %1447 = vmatprep.subr.mxu0 0.0
    %1448 = vmatpush1.msra.mxu0 0.0
    %1449 = vmatprep.subr.mxu0 0.0
    %1450 = vmatpush1.msra.mxu0 0.0
    %1451 = vmatprep.subr.mxu0 0.0
    %1452 = vmatpush1.msra.mxu0 0.0
    %1453 = vmatprep.subr.mxu0 0.0
    %1454 = vmatpush1.msra.mxu0 0.0
    %1455 = vmatprep.subr.mxu0 0.0
    %1456 = vmatpush1.msra.mxu0 0.0
    %1457 = vmatprep.subr.mxu0 0.0
    %1458 = vmatpush1.msra.mxu0 %v379
    %1459 = vmatprep.subr.mxu0 0.0
    %1460 = vmatpush1.msra.mxu0 %v378
    %1461 = vmatprep.subr.mxu0 0.0
    %1462 = vmatpush1.msra.mxu0 %v377
    %1463 = vmatprep.subr.mxu0 0.0
    %1464 = vmatpush1.msra.mxu0 %v376
    %1465 = vmatprep.subr.mxu0 0.0
    %1466 = vmatpush2.msra.mxu0 0.0
    %1467 = vmatprep.subr.mxu0 0.0
    %1468 = vmatpush2.msra.mxu0 0.0
    %1469 = vmatprep.subr.mxu0 0.0
    %1470 = vmatpush2.msra.mxu0 0.0
    %1471 = vmatprep.subr.mxu0 0.0
    %1472 = vmatpush2.msra.mxu0 0.0
    %1473 = vmatprep.subr.mxu0 0.0
    %1474 = vmatpush2.msra.mxu0 0.0
    %1475 = vmatprep.subr.mxu0 0.0
    %1476 = vmatpush2.msra.mxu0 0.0
    %1477 = vmatprep.subr.mxu0 0.0
    %1478 = vmatpush2.msra.mxu0 0.0
    %1479 = vmatprep.subr.mxu0 0.0
    %1480 = vmatpush2.msra.mxu0 0.0
    %1481 = vmatprep.subr.mxu0 0.0
    %1482 = vmatpush2.msra.mxu0 0.0
    %1483 = vmatprep.subr.mxu0 0.0
    %1484 = vmatpush2.msra.mxu0 0.0
    %1485 = vmatprep.subr.mxu0 0.0
    %1486 = vmatpush2.msra.mxu0 0.0
    %1487 = vmatprep.subr.mxu0 0.0
    %1488 = vmatpush2.msra.mxu0 0.0
    %1489 = vmatprep.subr.mxu0 0.0
    %1490 = vmatpush2.msra.mxu0 0.0
    %1491 = vmatprep.subr.mxu0 0.0
    %1492 = vmatpush2.msra.mxu0 0.0
    %1493 = vmatprep.subr.mxu0 0.0
    %1494 = vmatpush2.msra.mxu0 0.0
    %1495 = vmatprep.subr.mxu0 0.0
    %1496 = vmatpush2.msra.mxu0 0.0
    %1497 = vmatprep.mubr.f32.mxu0 0.0
    %1498 = vmatmul.mubr.f32.gmra.mxu0 %v1361
    %v1499 = vpop.f32.mrf.mxu0
    %v1500 = vadd.f32 0.0, %v1499
    %v1501 = vpop.f32.mrf.mxu0
    %1502 = vdwg.mxu0
    %v1503 = vadd.f32 %v1355, %v1430
    %v1504 = vxor.u32 %v1503, 2147483648
    %v1505 = vmul.f32 %v1504, 1.442695
    %v1506 = vpow.pop %v1505
    %v1507 = vadd.f32 %v1506, 1.0
    %v1508 = vrcp.pop %v1507
    %v1509 = vmul.f32 1.0, %v1508
    %v1510 = vadd.f32 %v1357, %v1500
    %v1511 = vxor.u32 %v1510, 2147483648
    %v1512 = vmul.f32 %v1511, 1.442695
    %v1513 = vpow.pop %v1512
    %v1514 = vadd.f32 %v1513, 1.0
    %v1515 = vrcp.pop %v1514
    %v1516 = vmul.f32 1.0, %v1515
    %1517 = vmatprep.subr.mxu0 0.0
    %1518 = vmatpush1.msra.mxu0 0.0
    %1519 = vmatprep.subr.mxu0 0.0
    %1520 = vmatpush1.msra.mxu0 0.0
    %1521 = vmatprep.subr.mxu0 0.0
    %1522 = vmatpush1.msra.mxu0 0.0
    %1523 = vmatprep.subr.mxu0 0.0
    %1524 = vmatpush1.msra.mxu0 0.0
    %1525 = vmatprep.subr.mxu0 0.0
    %1526 = vmatpush1.msra.mxu0 0.0
    %1527 = vmatprep.subr.mxu0 0.0
    %1528 = vmatpush1.msra.mxu0 0.0
    %1529 = vmatprep.subr.mxu0 0.0
    %1530 = vmatpush1.msra.mxu0 0.0
    %1531 = vmatprep.subr.mxu0 0.0
    %1532 = vmatpush1.msra.mxu0 0.0
    %1533 = vmatprep.subr.mxu0 0.0
    %1534 = vmatpush1.msra.mxu0 0.0
    %1535 = vmatprep.subr.mxu0 0.0
    %1536 = vmatpush1.msra.mxu0 0.0
    %1537 = vmatprep.subr.mxu0 0.0
    %1538 = vmatpush1.msra.mxu0 0.0
    %1539 = vmatprep.subr.mxu0 0.0
    %1540 = vmatpush1.msra.mxu0 0.0
    %1541 = vmatprep.subr.mxu0 0.0
    %1542 = vmatpush1.msra.mxu0 %v384
    %1543 = vmatprep.subr.mxu0 0.0
    %1544 = vmatpush1.msra.mxu0 %v383
    %1545 = vmatprep.subr.mxu0 0.0
    %1546 = vmatpush1.msra.mxu0 %v382
    %1547 = vmatprep.subr.mxu0 0.0
    %1548 = vmatpush1.msra.mxu0 %v381
    %1549 = vmatprep.subr.mxu0 0.0
    %1550 = vmatpush2.msra.mxu0 0.0
    %1551 = vmatprep.subr.mxu0 0.0
    %1552 = vmatpush2.msra.mxu0 0.0
    %1553 = vmatprep.subr.mxu0 0.0
    %1554 = vmatpush2.msra.mxu0 0.0
    %1555 = vmatprep.subr.mxu0 0.0
    %1556 = vmatpush2.msra.mxu0 0.0
    %1557 = vmatprep.subr.mxu0 0.0
    %1558 = vmatpush2.msra.mxu0 0.0
    %1559 = vmatprep.subr.mxu0 0.0
    %1560 = vmatpush2.msra.mxu0 0.0
    %1561 = vmatprep.subr.mxu0 0.0
    %1562 = vmatpush2.msra.mxu0 0.0
    %1563 = vmatprep.subr.mxu0 0.0
    %1564 = vmatpush2.msra.mxu0 0.0
    %1565 = vmatprep.subr.mxu0 0.0
    %1566 = vmatpush2.msra.mxu0 0.0
    %1567 = vmatprep.subr.mxu0 0.0
    %1568 = vmatpush2.msra.mxu0 0.0
    %1569 = vmatprep.subr.mxu0 0.0
    %1570 = vmatpush2.msra.mxu0 0.0
    %1571 = vmatprep.subr.mxu0 0.0
    %1572 = vmatpush2.msra.mxu0 0.0
    %1573 = vmatprep.subr.mxu0 0.0
    %1574 = vmatpush2.msra.mxu0 0.0
    %1575 = vmatprep.subr.mxu0 0.0
    %1576 = vmatpush2.msra.mxu0 0.0
    %1577 = vmatprep.subr.mxu0 0.0
    %1578 = vmatpush2.msra.mxu0 0.0
    %1579 = vmatprep.subr.mxu0 0.0
    %1580 = vmatpush2.msra.mxu0 0.0
    %1581 = vmatprep.mubr.f32.mxu0 0.0
    %1582 = vmatmul.mubr.f32.gmra.mxu0 %v1361
    %v1583 = vpop.f32.mrf.mxu0
    %v1584 = vadd.f32 %v390, %v1583
    %v1585 = vpop.f32.mrf.mxu0
    %1586 = vdwg.mxu0
    %v1587 = vmul.f32 %v1509, %v1584
    %v1588 = vadd.f32 %v1359, %v1587
    %v1589 = vtanh.pop %v1588
    %v1590 = vsub.f32 %v1351, %v1589
    %v1591 = vmul.f32 %v1516, %v1590
    %v1592 = vadd.f32 %v1589, %v1591
    %s1593 = scalar_lea.vmem [#allocation10], 16
    %1594 = vst.msk [vmem:[%s1593] sm:$0xf] %vm629, %v1592
    %s1595 = scalar_lea.vmem [#allocation2], 20
    %v1596 = vld [vmem:[%s1595] sm:$0xf]
    %s1597 = scalar_lea.vmem [#allocation3], 20
    %v1598 = vld [vmem:[%s1597] sm:$0xf]
    %s1599 = scalar_lea.vmem [#allocation4], 20
    %v1600 = vld [vmem:[%s1599] sm:$0xf]
    %v1602 = vsel %vm166, %v1592, 0
    %1604 = vmatprep.subr.mxu0 0.0
    %1605 = vmatpush1.msra.mxu0 0.0
    %1606 = vmatprep.subr.mxu0 0.0
    %1607 = vmatpush1.msra.mxu0 0.0
    %1608 = vmatprep.subr.mxu0 0.0
    %1609 = vmatpush1.msra.mxu0 0.0
    %1610 = vmatprep.subr.mxu0 0.0
    %1611 = vmatpush1.msra.mxu0 0.0
    %1612 = vmatprep.subr.mxu0 0.0
    %1613 = vmatpush1.msra.mxu0 0.0
    %1614 = vmatprep.subr.mxu0 0.0
    %1615 = vmatpush1.msra.mxu0 0.0
    %1616 = vmatprep.subr.mxu0 0.0
    %1617 = vmatpush1.msra.mxu0 0.0
    %1618 = vmatprep.subr.mxu0 0.0
    %1619 = vmatpush1.msra.mxu0 0.0
    %1620 = vmatprep.subr.mxu0 0.0
    %1621 = vmatpush1.msra.mxu0 0.0
    %1622 = vmatprep.subr.mxu0 0.0
    %1623 = vmatpush1.msra.mxu0 0.0
    %1624 = vmatprep.subr.mxu0 0.0
    %1625 = vmatpush1.msra.mxu0 0.0
    %1626 = vmatprep.subr.mxu0 0.0
    %1627 = vmatpush1.msra.mxu0 0.0
    %1628 = vmatprep.subr.mxu0 0.0
    %1629 = vmatpush1.msra.mxu0 %v374
    %1630 = vmatprep.subr.mxu0 0.0
    %1631 = vmatpush1.msra.mxu0 %v373
    %1632 = vmatprep.subr.mxu0 0.0
    %1633 = vmatpush1.msra.mxu0 %v372
    %1634 = vmatprep.subr.mxu0 0.0
    %1635 = vmatpush1.msra.mxu0 %v371
    %1636 = vmatprep.subr.mxu0 0.0
    %1637 = vmatpush2.msra.mxu0 0.0
    %1638 = vmatprep.subr.mxu0 0.0
    %1639 = vmatpush2.msra.mxu0 0.0
    %1640 = vmatprep.subr.mxu0 0.0
    %1641 = vmatpush2.msra.mxu0 0.0
    %1642 = vmatprep.subr.mxu0 0.0
    %1643 = vmatpush2.msra.mxu0 0.0
    %1644 = vmatprep.subr.mxu0 0.0
    %1645 = vmatpush2.msra.mxu0 0.0
    %1646 = vmatprep.subr.mxu0 0.0
    %1647 = vmatpush2.msra.mxu0 0.0
    %1648 = vmatprep.subr.mxu0 0.0
    %1649 = vmatpush2.msra.mxu0 0.0
    %1650 = vmatprep.subr.mxu0 0.0
    %1651 = vmatpush2.msra.mxu0 0.0
    %1652 = vmatprep.subr.mxu0 0.0
    %1653 = vmatpush2.msra.mxu0 0.0
    %1654 = vmatprep.subr.mxu0 0.0
    %1655 = vmatpush2.msra.mxu0 0.0
    %1656 = vmatprep.subr.mxu0 0.0
    %1657 = vmatpush2.msra.mxu0 0.0
    %1658 = vmatprep.subr.mxu0 0.0
    %1659 = vmatpush2.msra.mxu0 0.0
    %1660 = vmatprep.subr.mxu0 0.0
    %1661 = vmatpush2.msra.mxu0 0.0
    %1662 = vmatprep.subr.mxu0 0.0
    %1663 = vmatpush2.msra.mxu0 0.0
    %1664 = vmatprep.subr.mxu0 0.0
    %1665 = vmatpush2.msra.mxu0 0.0
    %1666 = vmatprep.subr.mxu0 0.0
    %1667 = vmatpush2.msra.mxu0 0.0
    %1668 = vmatprep.mubr.f32.mxu0 0.0
    %1669 = vmatmul.mubr.f32.gmra.mxu0 %v1602
    %v1670 = vpop.f32.mrf.mxu0
    %v1671 = vadd.f32 0.0, %v1670
    %v1672 = vpop.f32.mrf.mxu0
    %1673 = vdwg.mxu0
    %1674 = vmatprep.subr.mxu0 0.0
    %1675 = vmatpush1.msra.mxu0 0.0
    %1676 = vmatprep.subr.mxu0 0.0
    %1677 = vmatpush1.msra.mxu0 0.0
    %1678 = vmatprep.subr.mxu0 0.0
    %1679 = vmatpush1.msra.mxu0 0.0
    %1680 = vmatprep.subr.mxu0 0.0
    %1681 = vmatpush1.msra.mxu0 0.0
    %1682 = vmatprep.subr.mxu0 0.0
    %1683 = vmatpush1.msra.mxu0 0.0
    %1684 = vmatprep.subr.mxu0 0.0
    %1685 = vmatpush1.msra.mxu0 0.0
    %1686 = vmatprep.subr.mxu0 0.0
    %1687 = vmatpush1.msra.mxu0 0.0
    %1688 = vmatprep.subr.mxu0 0.0
    %1689 = vmatpush1.msra.mxu0 0.0
    %1690 = vmatprep.subr.mxu0 0.0
    %1691 = vmatpush1.msra.mxu0 0.0
    %1692 = vmatprep.subr.mxu0 0.0
    %1693 = vmatpush1.msra.mxu0 0.0
    %1694 = vmatprep.subr.mxu0 0.0
    %1695 = vmatpush1.msra.mxu0 0.0
    %1696 = vmatprep.subr.mxu0 0.0
    %1697 = vmatpush1.msra.mxu0 0.0
    %1698 = vmatprep.subr.mxu0 0.0
    %1699 = vmatpush1.msra.mxu0 %v379
    %1700 = vmatprep.subr.mxu0 0.0
    %1701 = vmatpush1.msra.mxu0 %v378
    %1702 = vmatprep.subr.mxu0 0.0
    %1703 = vmatpush1.msra.mxu0 %v377
    %1704 = vmatprep.subr.mxu0 0.0
    %1705 = vmatpush1.msra.mxu0 %v376
    %1706 = vmatprep.subr.mxu0 0.0
    %1707 = vmatpush2.msra.mxu0 0.0
    %1708 = vmatprep.subr.mxu0 0.0
    %1709 = vmatpush2.msra.mxu0 0.0
    %1710 = vmatprep.subr.mxu0 0.0
    %1711 = vmatpush2.msra.mxu0 0.0
    %1712 = vmatprep.subr.mxu0 0.0
    %1713 = vmatpush2.msra.mxu0 0.0
    %1714 = vmatprep.subr.mxu0 0.0
    %1715 = vmatpush2.msra.mxu0 0.0
    %1716 = vmatprep.subr.mxu0 0.0
    %1717 = vmatpush2.msra.mxu0 0.0
    %1718 = vmatprep.subr.mxu0 0.0
    %1719 = vmatpush2.msra.mxu0 0.0
    %1720 = vmatprep.subr.mxu0 0.0
    %1721 = vmatpush2.msra.mxu0 0.0
    %1722 = vmatprep.subr.mxu0 0.0
    %1723 = vmatpush2.msra.mxu0 0.0
    %1724 = vmatprep.subr.mxu0 0.0
    %1725 = vmatpush2.msra.mxu0 0.0
    %1726 = vmatprep.subr.mxu0 0.0
    %1727 = vmatpush2.msra.mxu0 0.0
    %1728 = vmatprep.subr.mxu0 0.0
    %1729 = vmatpush2.msra.mxu0 0.0
    %1730 = vmatprep.subr.mxu0 0.0
    %1731 = vmatpush2.msra.mxu0 0.0
    %1732 = vmatprep.subr.mxu0 0.0
    %1733 = vmatpush2.msra.mxu0 0.0
    %1734 = vmatprep.subr.mxu0 0.0
    %1735 = vmatpush2.msra.mxu0 0.0
    %1736 = vmatprep.subr.mxu0 0.0
    %1737 = vmatpush2.msra.mxu0 0.0
    %1738 = vmatprep.mubr.f32.mxu0 0.0
    %1739 = vmatmul.mubr.f32.gmra.mxu0 %v1602
    %v1740 = vpop.f32.mrf.mxu0
    %v1741 = vadd.f32 0.0, %v1740
    %v1742 = vpop.f32.mrf.mxu0
    %1743 = vdwg.mxu0
    %v1744 = vadd.f32 %v1596, %v1671
    %v1745 = vxor.u32 %v1744, 2147483648
    %v1746 = vmul.f32 %v1745, 1.442695
    %v1747 = vpow.pop %v1746
    %v1748 = vadd.f32 %v1747, 1.0
    %v1749 = vrcp.pop %v1748
    %v1750 = vmul.f32 1.0, %v1749
    %v1751 = vadd.f32 %v1598, %v1741
    %v1752 = vxor.u32 %v1751, 2147483648
    %v1753 = vmul.f32 %v1752, 1.442695
    %v1754 = vpow.pop %v1753
    %v1755 = vadd.f32 %v1754, 1.0
    %v1756 = vrcp.pop %v1755
    %v1757 = vmul.f32 1.0, %v1756
    %1758 = vmatprep.subr.mxu0 0.0
    %1759 = vmatpush1.msra.mxu0 0.0
    %1760 = vmatprep.subr.mxu0 0.0
    %1761 = vmatpush1.msra.mxu0 0.0
    %1762 = vmatprep.subr.mxu0 0.0
    %1763 = vmatpush1.msra.mxu0 0.0
    %1764 = vmatprep.subr.mxu0 0.0
    %1765 = vmatpush1.msra.mxu0 0.0
    %1766 = vmatprep.subr.mxu0 0.0
    %1767 = vmatpush1.msra.mxu0 0.0
    %1768 = vmatprep.subr.mxu0 0.0
    %1769 = vmatpush1.msra.mxu0 0.0
    %1770 = vmatprep.subr.mxu0 0.0
    %1771 = vmatpush1.msra.mxu0 0.0
    %1772 = vmatprep.subr.mxu0 0.0
    %1773 = vmatpush1.msra.mxu0 0.0
    %1774 = vmatprep.subr.mxu0 0.0
    %1775 = vmatpush1.msra.mxu0 0.0
    %1776 = vmatprep.subr.mxu0 0.0
    %1777 = vmatpush1.msra.mxu0 0.0
    %1778 = vmatprep.subr.mxu0 0.0
    %1779 = vmatpush1.msra.mxu0 0.0
    %1780 = vmatprep.subr.mxu0 0.0
    %1781 = vmatpush1.msra.mxu0 0.0
    %1782 = vmatprep.subr.mxu0 0.0
    %1783 = vmatpush1.msra.mxu0 %v384
    %1784 = vmatprep.subr.mxu0 0.0
    %1785 = vmatpush1.msra.mxu0 %v383
    %1786 = vmatprep.subr.mxu0 0.0
    %1787 = vmatpush1.msra.mxu0 %v382
    %1788 = vmatprep.subr.mxu0 0.0
    %1789 = vmatpush1.msra.mxu0 %v381
    %1790 = vmatprep.subr.mxu0 0.0
    %1791 = vmatpush2.msra.mxu0 0.0
    %1792 = vmatprep.subr.mxu0 0.0
    %1793 = vmatpush2.msra.mxu0 0.0
    %1794 = vmatprep.subr.mxu0 0.0
    %1795 = vmatpush2.msra.mxu0 0.0
    %1796 = vmatprep.subr.mxu0 0.0
    %1797 = vmatpush2.msra.mxu0 0.0
    %1798 = vmatprep.subr.mxu0 0.0
    %1799 = vmatpush2.msra.mxu0 0.0
    %1800 = vmatprep.subr.mxu0 0.0
    %1801 = vmatpush2.msra.mxu0 0.0
    %1802 = vmatprep.subr.mxu0 0.0
    %1803 = vmatpush2.msra.mxu0 0.0
    %1804 = vmatprep.subr.mxu0 0.0
    %1805 = vmatpush2.msra.mxu0 0.0
    %1806 = vmatprep.subr.mxu0 0.0
    %1807 = vmatpush2.msra.mxu0 0.0
    %1808 = vmatprep.subr.mxu0 0.0
    %1809 = vmatpush2.msra.mxu0 0.0
    %1810 = vmatprep.subr.mxu0 0.0
    %1811 = vmatpush2.msra.mxu0 0.0
    %1812 = vmatprep.subr.mxu0 0.0
    %1813 = vmatpush2.msra.mxu0 0.0
    %1814 = vmatprep.subr.mxu0 0.0
    %1815 = vmatpush2.msra.mxu0 0.0
    %1816 = vmatprep.subr.mxu0 0.0
    %1817 = vmatpush2.msra.mxu0 0.0
    %1818 = vmatprep.subr.mxu0 0.0
    %1819 = vmatpush2.msra.mxu0 0.0
    %1820 = vmatprep.subr.mxu0 0.0
    %1821 = vmatpush2.msra.mxu0 0.0
    %1822 = vmatprep.mubr.f32.mxu0 0.0
    %1823 = vmatmul.mubr.f32.gmra.mxu0 %v1602
    %v1824 = vpop.f32.mrf.mxu0
    %v1825 = vadd.f32 %v390, %v1824
    %v1826 = vpop.f32.mrf.mxu0
    %1827 = vdwg.mxu0
    %v1828 = vmul.f32 %v1750, %v1825
    %v1829 = vadd.f32 %v1600, %v1828
    %v1830 = vtanh.pop %v1829
    %v1831 = vsub.f32 %v1592, %v1830
    %v1832 = vmul.f32 %v1757, %v1831
    %v1833 = vadd.f32 %v1830, %v1832
    %s1834 = scalar_lea.vmem [#allocation10], 20
    %1835 = vst.msk [vmem:[%s1834] sm:$0xf] %vm629, %v1833
    %s1836 = scalar_lea.vmem [#allocation2], 24
    %v1837 = vld [vmem:[%s1836] sm:$0xf]
    %s1838 = scalar_lea.vmem [#allocation3], 24
    %v1839 = vld [vmem:[%s1838] sm:$0xf]
    %s1840 = scalar_lea.vmem [#allocation4], 24
    %v1841 = vld [vmem:[%s1840] sm:$0xf]
    %v1843 = vsel %vm166, %v1833, 0
    %1845 = vmatprep.subr.mxu0 0.0
    %1846 = vmatpush1.msra.mxu0 0.0
    %1847 = vmatprep.subr.mxu0 0.0
    %1848 = vmatpush1.msra.mxu0 0.0
    %1849 = vmatprep.subr.mxu0 0.0
    %1850 = vmatpush1.msra.mxu0 0.0
    %1851 = vmatprep.subr.mxu0 0.0
    %1852 = vmatpush1.msra.mxu0 0.0
    %1853 = vmatprep.subr.mxu0 0.0
    %1854 = vmatpush1.msra.mxu0 0.0
    %1855 = vmatprep.subr.mxu0 0.0
    %1856 = vmatpush1.msra.mxu0 0.0
    %1857 = vmatprep.subr.mxu0 0.0
    %1858 = vmatpush1.msra.mxu0 0.0
    %1859 = vmatprep.subr.mxu0 0.0
    %1860 = vmatpush1.msra.mxu0 0.0
    %1861 = vmatprep.subr.mxu0 0.0
    %1862 = vmatpush1.msra.mxu0 0.0
    %1863 = vmatprep.subr.mxu0 0.0
    %1864 = vmatpush1.msra.mxu0 0.0
    %1865 = vmatprep.subr.mxu0 0.0
    %1866 = vmatpush1.msra.mxu0 0.0
    %1867 = vmatprep.subr.mxu0 0.0
    %1868 = vmatpush1.msra.mxu0 0.0
    %1869 = vmatprep.subr.mxu0 0.0
    %1870 = vmatpush1.msra.mxu0 %v374
    %1871 = vmatprep.subr.mxu0 0.0
    %1872 = vmatpush1.msra.mxu0 %v373
    %1873 = vmatprep.subr.mxu0 0.0
    %1874 = vmatpush1.msra.mxu0 %v372
    %1875 = vmatprep.subr.mxu0 0.0
    %1876 = vmatpush1.msra.mxu0 %v371
    %1877 = vmatprep.subr.mxu0 0.0
    %1878 = vmatpush2.msra.mxu0 0.0
    %1879 = vmatprep.subr.mxu0 0.0
    %1880 = vmatpush2.msra.mxu0 0.0
    %1881 = vmatprep.subr.mxu0 0.0
    %1882 = vmatpush2.msra.mxu0 0.0
    %1883 = vmatprep.subr.mxu0 0.0
    %1884 = vmatpush2.msra.mxu0 0.0
    %1885 = vmatprep.subr.mxu0 0.0
    %1886 = vmatpush2.msra.mxu0 0.0
    %1887 = vmatprep.subr.mxu0 0.0
    %1888 = vmatpush2.msra.mxu0 0.0
    %1889 = vmatprep.subr.mxu0 0.0
    %1890 = vmatpush2.msra.mxu0 0.0
    %1891 = vmatprep.subr.mxu0 0.0
    %1892 = vmatpush2.msra.mxu0 0.0
    %1893 = vmatprep.subr.mxu0 0.0
    %1894 = vmatpush2.msra.mxu0 0.0
    %1895 = vmatprep.subr.mxu0 0.0
    %1896 = vmatpush2.msra.mxu0 0.0
    %1897 = vmatprep.subr.mxu0 0.0
    %1898 = vmatpush2.msra.mxu0 0.0
    %1899 = vmatprep.subr.mxu0 0.0
    %1900 = vmatpush2.msra.mxu0 0.0
    %1901 = vmatprep.subr.mxu0 0.0
    %1902 = vmatpush2.msra.mxu0 0.0
    %1903 = vmatprep.subr.mxu0 0.0
    %1904 = vmatpush2.msra.mxu0 0.0
    %1905 = vmatprep.subr.mxu0 0.0
    %1906 = vmatpush2.msra.mxu0 0.0
    %1907 = vmatprep.subr.mxu0 0.0
    %1908 = vmatpush2.msra.mxu0 0.0
    %1909 = vmatprep.mubr.f32.mxu0 0.0
    %1910 = vmatmul.mubr.f32.gmra.mxu0 %v1843
    %v1911 = vpop.f32.mrf.mxu0
    %v1912 = vadd.f32 0.0, %v1911
    %v1913 = vpop.f32.mrf.mxu0
    %1914 = vdwg.mxu0
    %1915 = vmatprep.subr.mxu0 0.0
    %1916 = vmatpush1.msra.mxu0 0.0
    %1917 = vmatprep.subr.mxu0 0.0
    %1918 = vmatpush1.msra.mxu0 0.0
    %1919 = vmatprep.subr.mxu0 0.0
    %1920 = vmatpush1.msra.mxu0 0.0
    %1921 = vmatprep.subr.mxu0 0.0
    %1922 = vmatpush1.msra.mxu0 0.0
    %1923 = vmatprep.subr.mxu0 0.0
    %1924 = vmatpush1.msra.mxu0 0.0
    %1925 = vmatprep.subr.mxu0 0.0
    %1926 = vmatpush1.msra.mxu0 0.0
    %1927 = vmatprep.subr.mxu0 0.0
    %1928 = vmatpush1.msra.mxu0 0.0
    %1929 = vmatprep.subr.mxu0 0.0
    %1930 = vmatpush1.msra.mxu0 0.0
    %1931 = vmatprep.subr.mxu0 0.0
    %1932 = vmatpush1.msra.mxu0 0.0
    %1933 = vmatprep.subr.mxu0 0.0
    %1934 = vmatpush1.msra.mxu0 0.0
    %1935 = vmatprep.subr.mxu0 0.0
    %1936 = vmatpush1.msra.mxu0 0.0
    %1937 = vmatprep.subr.mxu0 0.0
    %1938 = vmatpush1.msra.mxu0 0.0
    %1939 = vmatprep.subr.mxu0 0.0
    %1940 = vmatpush1.msra.mxu0 %v379
    %1941 = vmatprep.subr.mxu0 0.0
    %1942 = vmatpush1.msra.mxu0 %v378
    %1943 = vmatprep.subr.mxu0 0.0
    %1944 = vmatpush1.msra.mxu0 %v377
    %1945 = vmatprep.subr.mxu0 0.0
    %1946 = vmatpush1.msra.mxu0 %v376
    %1947 = vmatprep.subr.mxu0 0.0
    %1948 = vmatpush2.msra.mxu0 0.0
    %1949 = vmatprep.subr.mxu0 0.0
    %1950 = vmatpush2.msra.mxu0 0.0
    %1951 = vmatprep.subr.mxu0 0.0
    %1952 = vmatpush2.msra.mxu0 0.0
    %1953 = vmatprep.subr.mxu0 0.0
    %1954 = vmatpush2.msra.mxu0 0.0
    %1955 = vmatprep.subr.mxu0 0.0
    %1956 = vmatpush2.msra.mxu0 0.0
    %1957 = vmatprep.subr.mxu0 0.0
    %1958 = vmatpush2.msra.mxu0 0.0
    %1959 = vmatprep.subr.mxu0 0.0
    %1960 = vmatpush2.msra.mxu0 0.0
    %1961 = vmatprep.subr.mxu0 0.0
    %1962 = vmatpush2.msra.mxu0 0.0
    %1963 = vmatprep.subr.mxu0 0.0
    %1964 = vmatpush2.msra.mxu0 0.0
    %1965 = vmatprep.subr.mxu0 0.0
    %1966 = vmatpush2.msra.mxu0 0.0
    %1967 = vmatprep.subr.mxu0 0.0
    %1968 = vmatpush2.msra.mxu0 0.0
    %1969 = vmatprep.subr.mxu0 0.0
    %1970 = vmatpush2.msra.mxu0 0.0
    %1971 = vmatprep.subr.mxu0 0.0
    %1972 = vmatpush2.msra.mxu0 0.0
    %1973 = vmatprep.subr.mxu0 0.0
    %1974 = vmatpush2.msra.mxu0 0.0
    %1975 = vmatprep.subr.mxu0 0.0
    %1976 = vmatpush2.msra.mxu0 0.0
    %1977 = vmatprep.subr.mxu0 0.0
    %1978 = vmatpush2.msra.mxu0 0.0
    %1979 = vmatprep.mubr.f32.mxu0 0.0
    %1980 = vmatmul.mubr.f32.gmra.mxu0 %v1843
    %v1981 = vpop.f32.mrf.mxu0
    %v1982 = vadd.f32 0.0, %v1981
    %v1983 = vpop.f32.mrf.mxu0
    %1984 = vdwg.mxu0
    %v1985 = vadd.f32 %v1837, %v1912
    %v1986 = vxor.u32 %v1985, 2147483648
    %v1987 = vmul.f32 %v1986, 1.442695
    %v1988 = vpow.pop %v1987
    %v1989 = vadd.f32 %v1988, 1.0
    %v1990 = vrcp.pop %v1989
    %v1991 = vmul.f32 1.0, %v1990
    %v1992 = vadd.f32 %v1839, %v1982
    %v1993 = vxor.u32 %v1992, 2147483648
    %v1994 = vmul.f32 %v1993, 1.442695
    %v1995 = vpow.pop %v1994
    %v1996 = vadd.f32 %v1995, 1.0
    %v1997 = vrcp.pop %v1996
    %v1998 = vmul.f32 1.0, %v1997
    %1999 = vmatprep.subr.mxu0 0.0
    %2000 = vmatpush1.msra.mxu0 0.0
    %2001 = vmatprep.subr.mxu0 0.0
    %2002 = vmatpush1.msra.mxu0 0.0
    %2003 = vmatprep.subr.mxu0 0.0
    %2004 = vmatpush1.msra.mxu0 0.0
    %2005 = vmatprep.subr.mxu0 0.0
    %2006 = vmatpush1.msra.mxu0 0.0
    %2007 = vmatprep.subr.mxu0 0.0
    %2008 = vmatpush1.msra.mxu0 0.0
    %2009 = vmatprep.subr.mxu0 0.0
    %2010 = vmatpush1.msra.mxu0 0.0
    %2011 = vmatprep.subr.mxu0 0.0
    %2012 = vmatpush1.msra.mxu0 0.0
    %2013 = vmatprep.subr.mxu0 0.0
    %2014 = vmatpush1.msra.mxu0 0.0
    %2015 = vmatprep.subr.mxu0 0.0
    %2016 = vmatpush1.msra.mxu0 0.0
    %2017 = vmatprep.subr.mxu0 0.0
    %2018 = vmatpush1.msra.mxu0 0.0
    %2019 = vmatprep.subr.mxu0 0.0
    %2020 = vmatpush1.msra.mxu0 0.0
    %2021 = vmatprep.subr.mxu0 0.0
    %2022 = vmatpush1.msra.mxu0 0.0
    %2023 = vmatprep.subr.mxu0 0.0
    %2024 = vmatpush1.msra.mxu0 %v384
    %2025 = vmatprep.subr.mxu0 0.0
    %2026 = vmatpush1.msra.mxu0 %v383
    %2027 = vmatprep.subr.mxu0 0.0
    %2028 = vmatpush1.msra.mxu0 %v382
    %2029 = vmatprep.subr.mxu0 0.0
    %2030 = vmatpush1.msra.mxu0 %v381
    %2031 = vmatprep.subr.mxu0 0.0
    %2032 = vmatpush2.msra.mxu0 0.0
    %2033 = vmatprep.subr.mxu0 0.0
    %2034 = vmatpush2.msra.mxu0 0.0
    %2035 = vmatprep.subr.mxu0 0.0
    %2036 = vmatpush2.msra.mxu0 0.0
    %2037 = vmatprep.subr.mxu0 0.0
    %2038 = vmatpush2.msra.mxu0 0.0
    %2039 = vmatprep.subr.mxu0 0.0
    %2040 = vmatpush2.msra.mxu0 0.0
    %2041 = vmatprep.subr.mxu0 0.0
    %2042 = vmatpush2.msra.mxu0 0.0
    %2043 = vmatprep.subr.mxu0 0.0
    %2044 = vmatpush2.msra.mxu0 0.0
    %2045 = vmatprep.subr.mxu0 0.0
    %2046 = vmatpush2.msra.mxu0 0.0
    %2047 = vmatprep.subr.mxu0 0.0
    %2048 = vmatpush2.msra.mxu0 0.0
    %2049 = vmatprep.subr.mxu0 0.0
    %2050 = vmatpush2.msra.mxu0 0.0
    %2051 = vmatprep.subr.mxu0 0.0
    %2052 = vmatpush2.msra.mxu0 0.0
    %2053 = vmatprep.subr.mxu0 0.0
    %2054 = vmatpush2.msra.mxu0 0.0
    %2055 = vmatprep.subr.mxu0 0.0
    %2056 = vmatpush2.msra.mxu0 0.0
    %2057 = vmatprep.subr.mxu0 0.0
    %2058 = vmatpush2.msra.mxu0 0.0
    %2059 = vmatprep.subr.mxu0 0.0
    %2060 = vmatpush2.msra.mxu0 0.0
    %2061 = vmatprep.subr.mxu0 0.0
    %2062 = vmatpush2.msra.mxu0 0.0
    %2063 = vmatprep.mubr.f32.mxu0 0.0
    %2064 = vmatmul.mubr.f32.gmra.mxu0 %v1843
    %v2065 = vpop.f32.mrf.mxu0
    %v2066 = vadd.f32 %v390, %v2065
    %v2067 = vpop.f32.mrf.mxu0
    %2068 = vdwg.mxu0
    %v2069 = vmul.f32 %v1991, %v2066
    %v2070 = vadd.f32 %v1841, %v2069
    %v2071 = vtanh.pop %v2070
    %v2072 = vsub.f32 %v1833, %v2071
    %v2073 = vmul.f32 %v1998, %v2072
    %v2074 = vadd.f32 %v2071, %v2073
    %s2075 = scalar_lea.vmem [#allocation10], 24
    %2076 = vst.msk [vmem:[%s2075] sm:$0xf] %vm629, %v2074
    %s2077 = scalar_lea.vmem [#allocation2], 28
    %v2078 = vld [vmem:[%s2077] sm:$0xf]
    %s2079 = scalar_lea.vmem [#allocation3], 28
    %v2080 = vld [vmem:[%s2079] sm:$0xf]
    %s2081 = scalar_lea.vmem [#allocation4], 28
    %v2082 = vld [vmem:[%s2081] sm:$0xf]
    %v2084 = vsel %vm166, %v2074, 0
    %2086 = vmatprep.subr.mxu0 0.0
    %2087 = vmatpush1.msra.mxu0 0.0
    %2088 = vmatprep.subr.mxu0 0.0
    %2089 = vmatpush1.msra.mxu0 0.0
    %2090 = vmatprep.subr.mxu0 0.0
    %2091 = vmatpush1.msra.mxu0 0.0
    %2092 = vmatprep.subr.mxu0 0.0
    %2093 = vmatpush1.msra.mxu0 0.0
    %2094 = vmatprep.subr.mxu0 0.0
    %2095 = vmatpush1.msra.mxu0 0.0
    %2096 = vmatprep.subr.mxu0 0.0
    %2097 = vmatpush1.msra.mxu0 0.0
    %2098 = vmatprep.subr.mxu0 0.0
    %2099 = vmatpush1.msra.mxu0 0.0
    %2100 = vmatprep.subr.mxu0 0.0
    %2101 = vmatpush1.msra.mxu0 0.0
    %2102 = vmatprep.subr.mxu0 0.0
    %2103 = vmatpush1.msra.mxu0 0.0
    %2104 = vmatprep.subr.mxu0 0.0
    %2105 = vmatpush1.msra.mxu0 0.0
    %2106 = vmatprep.subr.mxu0 0.0
    %2107 = vmatpush1.msra.mxu0 0.0
    %2108 = vmatprep.subr.mxu0 0.0
    %2109 = vmatpush1.msra.mxu0 0.0
    %2110 = vmatprep.subr.mxu0 0.0
    %2111 = vmatpush1.msra.mxu0 %v374
    %2112 = vmatprep.subr.mxu0 0.0
    %2113 = vmatpush1.msra.mxu0 %v373
    %2114 = vmatprep.subr.mxu0 0.0
    %2115 = vmatpush1.msra.mxu0 %v372
    %2116 = vmatprep.subr.mxu0 0.0
    %2117 = vmatpush1.msra.mxu0 %v371
    %2118 = vmatprep.subr.mxu0 0.0
    %2119 = vmatpush2.msra.mxu0 0.0
    %2120 = vmatprep.subr.mxu0 0.0
    %2121 = vmatpush2.msra.mxu0 0.0
    %2122 = vmatprep.subr.mxu0 0.0
    %2123 = vmatpush2.msra.mxu0 0.0
    %2124 = vmatprep.subr.mxu0 0.0
    %2125 = vmatpush2.msra.mxu0 0.0
    %2126 = vmatprep.subr.mxu0 0.0
    %2127 = vmatpush2.msra.mxu0 0.0
    %2128 = vmatprep.subr.mxu0 0.0
    %2129 = vmatpush2.msra.mxu0 0.0
    %2130 = vmatprep.subr.mxu0 0.0
    %2131 = vmatpush2.msra.mxu0 0.0
    %2132 = vmatprep.subr.mxu0 0.0
    %2133 = vmatpush2.msra.mxu0 0.0
    %2134 = vmatprep.subr.mxu0 0.0
    %2135 = vmatpush2.msra.mxu0 0.0
    %2136 = vmatprep.subr.mxu0 0.0
    %2137 = vmatpush2.msra.mxu0 0.0
    %2138 = vmatprep.subr.mxu0 0.0
    %2139 = vmatpush2.msra.mxu0 0.0
    %2140 = vmatprep.subr.mxu0 0.0
    %2141 = vmatpush2.msra.mxu0 0.0
    %2142 = vmatprep.subr.mxu0 0.0
    %2143 = vmatpush2.msra.mxu0 0.0
    %2144 = vmatprep.subr.mxu0 0.0
    %2145 = vmatpush2.msra.mxu0 0.0
    %2146 = vmatprep.subr.mxu0 0.0
    %2147 = vmatpush2.msra.mxu0 0.0
    %2148 = vmatprep.subr.mxu0 0.0
    %2149 = vmatpush2.msra.mxu0 0.0
    %2150 = vmatprep.mubr.f32.mxu0 0.0
    %2151 = vmatmul.mubr.f32.gmra.mxu0 %v2084
    %v2152 = vpop.f32.mrf.mxu0
    %v2153 = vadd.f32 0.0, %v2152
    %v2154 = vpop.f32.mrf.mxu0
    %2155 = vdwg.mxu0
    %2156 = vmatprep.subr.mxu0 0.0
    %2157 = vmatpush1.msra.mxu0 0.0
    %2158 = vmatprep.subr.mxu0 0.0
    %2159 = vmatpush1.msra.mxu0 0.0
    %2160 = vmatprep.subr.mxu0 0.0
    %2161 = vmatpush1.msra.mxu0 0.0
    %2162 = vmatprep.subr.mxu0 0.0
    %2163 = vmatpush1.msra.mxu0 0.0
    %2164 = vmatprep.subr.mxu0 0.0
    %2165 = vmatpush1.msra.mxu0 0.0
    %2166 = vmatprep.subr.mxu0 0.0
    %2167 = vmatpush1.msra.mxu0 0.0
    %2168 = vmatprep.subr.mxu0 0.0
    %2169 = vmatpush1.msra.mxu0 0.0
    %2170 = vmatprep.subr.mxu0 0.0
    %2171 = vmatpush1.msra.mxu0 0.0
    %2172 = vmatprep.subr.mxu0 0.0
    %2173 = vmatpush1.msra.mxu0 0.0
    %2174 = vmatprep.subr.mxu0 0.0
    %2175 = vmatpush1.msra.mxu0 0.0
    %2176 = vmatprep.subr.mxu0 0.0
    %2177 = vmatpush1.msra.mxu0 0.0
    %2178 = vmatprep.subr.mxu0 0.0
    %2179 = vmatpush1.msra.mxu0 0.0
    %2180 = vmatprep.subr.mxu0 0.0
    %2181 = vmatpush1.msra.mxu0 %v379
    %2182 = vmatprep.subr.mxu0 0.0
    %2183 = vmatpush1.msra.mxu0 %v378
    %2184 = vmatprep.subr.mxu0 0.0
    %2185 = vmatpush1.msra.mxu0 %v377
    %2186 = vmatprep.subr.mxu0 0.0
    %2187 = vmatpush1.msra.mxu0 %v376
    %2188 = vmatprep.subr.mxu0 0.0
    %2189 = vmatpush2.msra.mxu0 0.0
    %2190 = vmatprep.subr.mxu0 0.0
    %2191 = vmatpush2.msra.mxu0 0.0
    %2192 = vmatprep.subr.mxu0 0.0
    %2193 = vmatpush2.msra.mxu0 0.0
    %2194 = vmatprep.subr.mxu0 0.0
    %2195 = vmatpush2.msra.mxu0 0.0
    %2196 = vmatprep.subr.mxu0 0.0
    %2197 = vmatpush2.msra.mxu0 0.0
    %2198 = vmatprep.subr.mxu0 0.0
    %2199 = vmatpush2.msra.mxu0 0.0
    %2200 = vmatprep.subr.mxu0 0.0
    %2201 = vmatpush2.msra.mxu0 0.0
    %2202 = vmatprep.subr.mxu0 0.0
    %2203 = vmatpush2.msra.mxu0 0.0
    %2204 = vmatprep.subr.mxu0 0.0
    %2205 = vmatpush2.msra.mxu0 0.0
    %2206 = vmatprep.subr.mxu0 0.0
    %2207 = vmatpush2.msra.mxu0 0.0
    %2208 = vmatprep.subr.mxu0 0.0
    %2209 = vmatpush2.msra.mxu0 0.0
    %2210 = vmatprep.subr.mxu0 0.0
    %2211 = vmatpush2.msra.mxu0 0.0
    %2212 = vmatprep.subr.mxu0 0.0
    %2213 = vmatpush2.msra.mxu0 0.0
    %2214 = vmatprep.subr.mxu0 0.0
    %2215 = vmatpush2.msra.mxu0 0.0
    %2216 = vmatprep.subr.mxu0 0.0
    %2217 = vmatpush2.msra.mxu0 0.0
    %2218 = vmatprep.subr.mxu0 0.0
    %2219 = vmatpush2.msra.mxu0 0.0
    %2220 = vmatprep.mubr.f32.mxu0 0.0
    %2221 = vmatmul.mubr.f32.gmra.mxu0 %v2084
    %v2222 = vpop.f32.mrf.mxu0
    %v2223 = vadd.f32 0.0, %v2222
    %v2224 = vpop.f32.mrf.mxu0
    %2225 = vdwg.mxu0
    %v2226 = vadd.f32 %v2078, %v2153
    %v2227 = vxor.u32 %v2226, 2147483648
    %v2228 = vmul.f32 %v2227, 1.442695
    %v2229 = vpow.pop %v2228
    %v2230 = vadd.f32 %v2229, 1.0
    %v2231 = vrcp.pop %v2230
    %v2232 = vmul.f32 1.0, %v2231
    %v2233 = vadd.f32 %v2080, %v2223
    %v2234 = vxor.u32 %v2233, 2147483648
    %v2235 = vmul.f32 %v2234, 1.442695
    %v2236 = vpow.pop %v2235
    %v2237 = vadd.f32 %v2236, 1.0
    %v2238 = vrcp.pop %v2237
    %v2239 = vmul.f32 1.0, %v2238
    %2240 = vmatprep.subr.mxu0 0.0
    %2241 = vmatpush1.msra.mxu0 0.0
    %2242 = vmatprep.subr.mxu0 0.0
    %2243 = vmatpush1.msra.mxu0 0.0
    %2244 = vmatprep.subr.mxu0 0.0
    %2245 = vmatpush1.msra.mxu0 0.0
    %2246 = vmatprep.subr.mxu0 0.0
    %2247 = vmatpush1.msra.mxu0 0.0
    %2248 = vmatprep.subr.mxu0 0.0
    %2249 = vmatpush1.msra.mxu0 0.0
    %2250 = vmatprep.subr.mxu0 0.0
    %2251 = vmatpush1.msra.mxu0 0.0
    %2252 = vmatprep.subr.mxu0 0.0
    %2253 = vmatpush1.msra.mxu0 0.0
    %2254 = vmatprep.subr.mxu0 0.0
    %2255 = vmatpush1.msra.mxu0 0.0
    %2256 = vmatprep.subr.mxu0 0.0
    %2257 = vmatpush1.msra.mxu0 0.0
    %2258 = vmatprep.subr.mxu0 0.0
    %2259 = vmatpush1.msra.mxu0 0.0
    %2260 = vmatprep.subr.mxu0 0.0
    %2261 = vmatpush1.msra.mxu0 0.0
    %2262 = vmatprep.subr.mxu0 0.0
    %2263 = vmatpush1.msra.mxu0 0.0
    %2264 = vmatprep.subr.mxu0 0.0
    %2265 = vmatpush1.msra.mxu0 %v384
    %2266 = vmatprep.subr.mxu0 0.0
    %2267 = vmatpush1.msra.mxu0 %v383
    %2268 = vmatprep.subr.mxu0 0.0
    %2269 = vmatpush1.msra.mxu0 %v382
    %2270 = vmatprep.subr.mxu0 0.0
    %2271 = vmatpush1.msra.mxu0 %v381
    %2272 = vmatprep.subr.mxu0 0.0
    %2273 = vmatpush2.msra.mxu0 0.0
    %2274 = vmatprep.subr.mxu0 0.0
    %2275 = vmatpush2.msra.mxu0 0.0
    %2276 = vmatprep.subr.mxu0 0.0
    %2277 = vmatpush2.msra.mxu0 0.0
    %2278 = vmatprep.subr.mxu0 0.0
    %2279 = vmatpush2.msra.mxu0 0.0
    %2280 = vmatprep.subr.mxu0 0.0
    %2281 = vmatpush2.msra.mxu0 0.0
    %2282 = vmatprep.subr.mxu0 0.0
    %2283 = vmatpush2.msra.mxu0 0.0
    %2284 = vmatprep.subr.mxu0 0.0
    %2285 = vmatpush2.msra.mxu0 0.0
    %2286 = vmatprep.subr.mxu0 0.0
    %2287 = vmatpush2.msra.mxu0 0.0
    %2288 = vmatprep.subr.mxu0 0.0
    %2289 = vmatpush2.msra.mxu0 0.0
    %2290 = vmatprep.subr.mxu0 0.0
    %2291 = vmatpush2.msra.mxu0 0.0
    %2292 = vmatprep.subr.mxu0 0.0
    %2293 = vmatpush2.msra.mxu0 0.0
    %2294 = vmatprep.subr.mxu0 0.0
    %2295 = vmatpush2.msra.mxu0 0.0
    %2296 = vmatprep.subr.mxu0 0.0
    %2297 = vmatpush2.msra.mxu0 0.0
    %2298 = vmatprep.subr.mxu0 0.0
    %2299 = vmatpush2.msra.mxu0 0.0
    %2300 = vmatprep.subr.mxu0 0.0
    %2301 = vmatpush2.msra.mxu0 0.0
    %2302 = vmatprep.subr.mxu0 0.0
    %2303 = vmatpush2.msra.mxu0 0.0
    %2304 = vmatprep.mubr.f32.mxu0 0.0
    %2305 = vmatmul.mubr.f32.gmra.mxu0 %v2084
    %v2306 = vpop.f32.mrf.mxu0
    %v2307 = vadd.f32 %v390, %v2306
    %v2308 = vpop.f32.mrf.mxu0
    %2309 = vdwg.mxu0
    %v2310 = vmul.f32 %v2232, %v2307
    %v2311 = vadd.f32 %v2082, %v2310
    %v2312 = vtanh.pop %v2311
    %v2313 = vsub.f32 %v2074, %v2312
    %v2314 = vmul.f32 %v2239, %v2313
    %v2315 = vadd.f32 %v2312, %v2314
    %s2316 = scalar_lea.vmem [#allocation10], 28
    %2317 = vst.msk [vmem:[%s2316] sm:$0xf] %vm629, %v2315
    %2318 = vst.msk [vmem:[#allocation11] sm:$0xf] %vm629, %v2315
    // Predicated region
    $region34: #{tpu_custom_call.1} parent=1 // pred_check
      _
    $region35: #{tpu_custom_call.1} parent=1 // pred_check_branch
      %2320 = sbr.rel (0) target = $region37
    $region36: #{tpu_custom_call.1} parent=1 // pred_region
      %s2322 = ssub.s32 512, 512
      %2323 = vsyncadd [#allocation7], %s2322
      %s2324 = sshll.u32 [#allocation10], 4
      %s2325 = int_to_ptr.vmem [resolvable:$true] %s2324
      %2330 = dma.vmem_to_hbm [thread:$0]  %s2325, 512, %s6, [#allocation7], 64, 64, 4
    $region37: #{tpu_custom_call.1} parent=1 // pred_fallthru
      _
    // Predicated region
    $region38: #{tpu_custom_call.1} parent=1 // pred_check
      _
    $region39: #{tpu_custom_call.1} parent=1 // pred_check_branch
      %2332 = sbr.rel (0) target = $region41
    $region40: #{tpu_custom_call.1} parent=1 // pred_region
      %s2334 = ssub.s32 64, 64
      %2335 = vsyncadd [#allocation12], %s2334
      %s2337 = sshll.u32 [#allocation11], 4
      %s2338 = int_to_ptr.vmem [resolvable:$true] %s2337
      %2340 = dma.vmem_to_hbm [thread:$0]  %s2338, 64, %s7, [#allocation12]
    $region41: #{tpu_custom_call.1} parent=1 // pred_fallthru
      _
    // Predicated region
    $region42: #{tpu_custom_call.1} parent=1 // pred_check
      _
    $region43: #{tpu_custom_call.1} parent=1 // pred_check_branch
      %2342 = sbr.rel (0) target = $region45
    $region44: #{tpu_custom_call.1} parent=1 // pred_region
      %2343 = dma.done [#allocation7], 512
    $region45: #{tpu_custom_call.1} parent=1 // pred_fallthru
      _
    // Predicated region
    $region46: #{tpu_custom_call.1} parent=1 // pred_check
      _
    $region47: #{tpu_custom_call.1} parent=1 // pred_check_branch
      %2345 = sbr.rel (0) target = $region49
    $region48: #{tpu_custom_call.1} parent=1 // pred_region
      %2346 = dma.done [#allocation12], 64
    $region49: #{tpu_custom_call.1} parent=1 // pred_fallthru
      _
    %2347 = vsyncpa [#allocation6], 1
    %2348 = vsyncpa [#allocation9], 1
    %2349 = vsyncpa [#allocation7], 1
    %2350 = vsyncpa [#allocation12], 1

</llo_original>
